<compile_context>
chip_gen: v6e
topology: v6e:2x2x1
jax: 0.10.0
libtpu: 0.0.40
codegen_flags: <defaults>
</compile_context>

<pallas_src>
from functools import partial

import jax
import jax.numpy as jnp
import numpy as np
from jax.experimental import pallas as pl
from jax.experimental.pallas import tpu as pltpu

OC = 128          # seqCNN1D_outChannels (fixed in the module)
POOL = 2          # seqCNN1D_poolingRate
KSIZE = 2         # seqCNN1D_kernelSize
SAL_FC = 64       # saliencyFC_outputSize
EPS = 1e-5        # BatchNorm eps


# ----------------------------------------------------------------------------
# Pallas kernel: 4 lane-dense matmuls per batch tile, no in-kernel relayouts.
# ----------------------------------------------------------------------------
def _dgaze_kernel(x_ref, w0_ref, b0_ref, w1_ref, b1_ref, w2_ref, b2_ref,
                  w3_ref, b3_ref, out_ref, stage_ref):
    half = (w0_ref.shape[1] - 128) // 2            # 128 * Lp

    # Fused [conv-Toeplitz | saliency-FC] matmul + folded BN biases + ReLU.
    h = jnp.dot(x_ref[...], w0_ref[...],
                preferred_element_type=jnp.float32) + b0_ref[...]
    h = jnp.maximum(h, 0.0)                        # (TB, 2*half + 128) f32

    # Conv epilogue: MaxPool1d(2) = max of even/odd column halves, written once
    # as bf16 straight into the FC1 staging scratch; sal lands contiguously.
    stage_ref[:, :half] = jnp.maximum(h[:, :half],
                                      h[:, half:2 * half]).astype(jnp.bfloat16)
    stage_ref[:, half:] = h[:, 2 * half:].astype(jnp.bfloat16)

    # PrdFC: single K=(half+128) matmul, then two 128x128 matmuls (BN folded).
    z1 = jnp.maximum(
        jnp.dot(stage_ref[...], w1_ref[...],
                preferred_element_type=jnp.float32) + b1_ref[...], 0.0)
    z2 = jnp.maximum(
        jnp.dot(z1.astype(jnp.bfloat16), w2_ref[...],
                preferred_element_type=jnp.float32) + b2_ref[...], 0.0)
    out_ref[...] = (jnp.dot(z2.astype(jnp.bfloat16), w3_ref[...],
                            preferred_element_type=jnp.float32)
                    + b3_ref[...]).astype(out_ref.dtype)


# ----------------------------------------------------------------------------
# One-time (per parameter set) host-side packing: BN folding, block-Toeplitz
# conv weight, fc1 row permutation, zero padding, bf16 casts.
# ----------------------------------------------------------------------------
def _fold_bn_np(bn):
    s = np.asarray(bn["gamma"]) / np.sqrt(np.asarray(bn["var"]) + EPS)
    b = np.asarray(bn["beta"]) - np.asarray(bn["mean"]) * s
    return s.astype(np.float32), b.astype(np.float32)


def prepare_params(params, seqLength, saliencySize, n_output):
    L = seqLength
    Lc = L - KSIZE + 1
    Lp = Lc // POOL
    half = OC * Lp                                   # 128 * Lp
    Kin = 2 * L + saliencySize
    Kpad = ((Kin + 127) // 128) * 128                # lane-dense input K

    s1, b1 = _fold_bn_np(params["bn1"])
    ss, sb = _fold_bn_np(params["bn_sal"])
    s2, b2 = _fold_bn_np(params["bn_fc1"])
    s3, b3 = _fold_bn_np(params["bn_fc2"])

    # Fused first-stage weight (Kpad, 2*half + 128); columns [even | odd | sal].
    cw = np.asarray(params["conv_w"], np.float32) * s1[:, None, None]   # (128,2,2)
    W0 = np.zeros((Kpad, 2 * half + 128), np.float32)
    for p in range(Lp):
        for par, t0 in ((0, 2 * p), (1, 2 * p + 1)):     # even / odd conv position
            col = par * half + p * OC
            for k in range(KSIZE):
                row = (t0 + k) * 2                       # x_seq column = t*2 + c
                W0[row:row + 2, col:col + OC] = cw[:, :, k].T
    W0[2 * L:2 * L + saliencySize, 2 * half:2 * half + SAL_FC] = (
        np.asarray(params["sal_w"], np.float32).T * ss[None, :])

    b0 = np.zeros((1, 2 * half + 128), np.float32)
    b0[0, :2 * half] = np.tile(np.asarray(params["conv_b"]) * s1 + b1, 2 * Lp)
    b0[0, 2 * half:2 * half + SAL_FC] = np.asarray(params["sal_b"]) * ss + sb

    # FC1: seq rows re-ordered from PyTorch channel-major (o*Lp+p) to kernel
    # layout (p*128+o); sal rows padded 64 -> 128; BN folded; single (half+128,128).
    fc1_w = np.asarray(params["fc1_w"], np.float32)      # (128, half + 64)
    w1 = np.zeros((half + 128, 128), np.float32)
    w1[:half] = (fc1_w[:, :half].T.reshape(OC, Lp, 128)
                 .transpose(1, 0, 2).reshape(half, 128)) * s2[None, :]
    w1[half:half + SAL_FC] = fc1_w[:, half:].T * s2[None, :]
    b1f = (np.asarray(params["fc1_b"]) * s2 + b2)[None, :].astype(np.float32)

    w2 = np.asarray(params["fc2_w"], np.float32).T * s3[None, :]
    b2f = (np.asarray(params["fc2_b"]) * s3 + b3)[None, :].astype(np.float32)

    # FC3 padded to 128 output lanes so the final store is lane-dense.
    w3 = np.zeros((128, 128), np.float32)
    w3[:, :n_output] = np.asarray(params["fc3_w"], np.float32).T
    b3f = np.zeros((1, 128), np.float32)
    b3f[0, :n_output] = np.asarray(params["fc3_b"], np.float32)

    bf = lambda a: jnp.asarray(a, jnp.bfloat16)
    f32 = lambda a: jnp.asarray(a, jnp.float32)
    return (bf(W0), f32(b0), bf(w1), f32(b1f), bf(w2), f32(b2f), bf(w3), f32(b3f))


# ----------------------------------------------------------------------------
# Batch tiling: multiple of 128 (v5e MXU M-fill), >=2 grid steps when B > 128
# so v7x's two TensorCores both run, cap 1024 (fits v5e/v7x scoped VMEM).
# ----------------------------------------------------------------------------
def _pick_batch_tile(B):
    TB_CAP = 1024
    if B <= 128:
        return 128, 128                              # tiny batch: single tile
    if B <= 2 * TB_CAP:
        Bp = -(-B // 256) * 256                      # round up to 256
        return Bp, Bp // 2                           # exactly 2 grid steps
    Bp = -(-B // TB_CAP) * TB_CAP
    return Bp, TB_CAP


# ----------------------------------------------------------------------------
# Forward: only input layout plumbing + pallas_call (weights pre-packed).
# ----------------------------------------------------------------------------
@partial(jax.jit, static_argnums=(2, 3, 4, 5))
def dgaze_forward_pallas(x, packed, seqLength, seqFeatureNum, saliencySize, n_output):
    B = x.shape[0]
    L, F = seqLength, seqFeatureNum
    seqSize = L * F
    Lc = L - KSIZE + 1
    Lp = Lc // POOL
    half = OC * Lp
    Kin = 2 * L + saliencySize
    Kpad = ((Kin + 127) // 128) * 128

    # Input layout plumbing (no compute): [seq(:, :, :2) flattened | saliency],
    # bf16, padded to a lane-dense K and a 128-multiple batch.
    seq = x[:, :seqSize].reshape(B, L, F)[:, :, :2].reshape(B, 2 * L)
    x_in = jnp.concatenate([seq, x[:, seqSize:]], axis=1).astype(jnp.bfloat16)

    Bp, TB = _pick_batch_tile(B)
    x_in = jnp.pad(x_in, ((0, Bp - B), (0, Kpad - Kin)))

    w0, b0, w1, b1f, w2, b2f, w3, b3f = packed
    weights = (w0, b0, w1, b1f, w2, b2f, w3, b3f)
    in_specs = ([pl.BlockSpec((TB, Kpad), lambda i: (i, 0))]
                + [pl.BlockSpec(w.shape, lambda i: (0, 0)) for w in weights])

    out = pl.pallas_call(
        _dgaze_kernel,
        out_shape=jax.ShapeDtypeStruct((Bp, 128), jnp.bfloat16),
        grid=(Bp // TB,),
        in_specs=in_specs,
        out_specs=pl.BlockSpec((TB, 128), lambda i: (i, 0)),
        scratch_shapes=[pltpu.VMEM((TB, half + 128), jnp.bfloat16)],
        compiler_params=pltpu.CompilerParams(
            dimension_semantics=("parallel",),
            vmem_limit_bytes=32 * 1024 * 1024),
    )(x_in, *weights)
    return out[:B, :n_output].astype(jnp.float32)


# ----------------------------------------------------------------------------
# Pure-JAX reference mirroring the PyTorch graph (for verification).
# ----------------------------------------------------------------------------
def _fold_bn(bn):
    s = bn["gamma"] / jnp.sqrt(bn["var"] + EPS)
    b = bn["beta"] - bn["mean"] * s
    return s.astype(jnp.float32), b.astype(jnp.float32)


def dgaze_forward_ref(x, params, seqLength, seqFeatureNum, saliencySize, n_output):
    B = x.shape[0]
    L, F = seqLength, seqFeatureNum
    seqSize = L * F
    Lc = L - KSIZE + 1
    Lp = Lc // POOL

    seq = x[:, :seqSize].reshape(B, L, F)[:, :, :2].transpose(0, 2, 1)   # (B, 2, L)
    cw, cb = params["conv_w"], params["conv_b"]
    conv = (jnp.einsum('bcl,oc->bol', seq[:, :, :Lc], cw[:, :, 0])
            + jnp.einsum('bcl,oc->bol', seq[:, :, 1:Lc + 1], cw[:, :, 1])
            + cb[None, :, None])                                         # (B, 128, Lc)
    s1, b1 = _fold_bn(params["bn1"])
    h = jnp.maximum(conv * s1[None, :, None] + b1[None, :, None], 0.0)
    hp = jnp.max(h[:, :, :POOL * Lp].reshape(B, OC, Lp, POOL), axis=-1)
    seqOut = hp.reshape(B, OC * Lp)                                      # channel-major

    xsal = x[:, seqSize:]
    ss, sb = _fold_bn(params["bn_sal"])
    salOut = jnp.maximum((xsal @ params["sal_w"].T + params["sal_b"]) * ss + sb, 0.0)

    prd = jnp.concatenate([seqOut, salOut], axis=1)
    s2, b2 = _fold_bn(params["bn_fc1"])
    z1 = jnp.maximum((prd @ params["fc1_w"].T + params["fc1_b"]) * s2 + b2, 0.0)
    s3, b3 = _fold_bn(params["bn_fc2"])
    z2 = jnp.maximum((z1 @ params["fc2_w"].T + params["fc2_b"]) * s3 + b3, 0.0)
    return z2 @ params["fc3_w"].T + params["fc3_b"]


# ----------------------------------------------------------------------------
# Deterministic synthetic parameters (PyTorch weight shapes).
# ----------------------------------------------------------------------------
def init_params(key, seqLength, saliencySize, n_output):
    Lc = seqLength - KSIZE + 1
    Lp = Lc // POOL
    prd_in = OC * Lp + SAL_FC                 # prdFC_inputSize
    ks = jax.random.split(key, 16)

    def bn(k, n):
        k1, k2, k3, k4 = jax.random.split(k, 4)
        return dict(gamma=1.0 + 0.1 * jax.random.normal(k1, (n,), jnp.float32),
                    beta=0.1 * jax.random.normal(k2, (n,), jnp.float32),
                    mean=0.1 * jax.random.normal(k3, (n,), jnp.float32),
                    var=1.0 + 0.1 * jnp.abs(jax.random.normal(k4, (n,), jnp.float32)))

    return {
        "conv_w": 0.1 * jax.random.normal(ks[0], (OC, 2, KSIZE), jnp.float32),
        "conv_b": 0.05 * jax.random.normal(ks[1], (OC,), jnp.float32),
        "bn1": bn(ks[2], OC),
        "sal_w": 0.05 * jax.random.normal(ks[3], (SAL_FC, saliencySize), jnp.float32),
        "sal_b": 0.05 * jax.random.normal(ks[4], (SAL_FC,), jnp.float32),
        "bn_sal": bn(ks[5], SAL_FC),
        "fc1_w": 0.05 * jax.random.normal(ks[6], (128, prd_in), jnp.float32),
        "fc1_b": 0.05 * jax.random.normal(ks[7], (128,), jnp.float32),
        "bn_fc1": bn(ks[8], 128),
        "fc2_w": 0.05 * jax.random.normal(ks[9], (128, 128), jnp.float32),
        "fc2_b": 0.05 * jax.random.normal(ks[10], (128,), jnp.float32),
        "bn_fc2": bn(ks[11], 128),
        "fc3_w": 0.05 * jax.random.normal(ks[12], (n_output, 128), jnp.float32),
        "fc3_b": 0.05 * jax.random.normal(ks[13], (n_output,), jnp.float32),
    }


if __name__ == "__main__":
    # Small shapes consistent with the module (dropout = eval-mode identity).
    seqLength, seqFeatureNum = 8, 8
    saliencyWidth, saliencyNum = 4, 2
    n_output = 2
    B = 8
    seqSize = seqLength * seqFeatureNum
    saliencySize = saliencyWidth * saliencyWidth * saliencyNum
    in_dim = seqSize + saliencySize

    key = jax.random.PRNGKey(0)
    kx, kp = jax.random.split(key)
    x = jax.random.normal(kx, (B, in_dim), jnp.float32)
    params = init_params(kp, seqLength, saliencySize, n_output)

    # One-time weight packing (hoisted out of the forward path).
    packed = prepare_params(params, seqLength, saliencySize, n_output)

    out = dgaze_forward_pallas(x, packed, seqLength, seqFeatureNum,
                               saliencySize, n_output)
    out = jax.block_until_ready(out)

    ref = jax.block_until_ready(
        dgaze_forward_ref(x, params, seqLength, seqFeatureNum,
                          saliencySize, n_output))

    assert out.shape == (B, n_output), out.shape
    np.testing.assert_allclose(np.asarray(out), np.asarray(ref), rtol=2e-2, atol=2e-2)
    print("KERNEL_OK")
</pallas_src>

<mosaic_0001>
module attributes {stable_mosaic.version = 11 : i64} {
  func.func @_dgaze_kernel(%arg0: i32, %arg1: memref<128x128xbf16, #tpu.memory_space<vmem>>, %arg2: memref<128x896xbf16, #tpu.memory_space<vmem>>, %arg3: memref<1x896xf32, #tpu.memory_space<vmem>>, %arg4: memref<512x128xbf16, #tpu.memory_space<vmem>>, %arg5: memref<1x128xf32, #tpu.memory_space<vmem>>, %arg6: memref<128x128xbf16, #tpu.memory_space<vmem>>, %arg7: memref<1x128xf32, #tpu.memory_space<vmem>>, %arg8: memref<128x128xbf16, #tpu.memory_space<vmem>>, %arg9: memref<1x128xf32, #tpu.memory_space<vmem>>, %arg10: memref<128x128xbf16, #tpu.memory_space<vmem>>, %arg11: memref<128x512xbf16, #tpu.memory_space<vmem>>) attributes {dimension_semantics = [#tpu.dimension_semantics<parallel>], iteration_bounds = array<i64: 1>, scalar_prefetch = 0 : i64, scratch_operands = 1 : i64, tpu.core_type = #tpu.core_type<tc>, window_params = [{transform_indices = @transform_0, window_bounds = array<i64: 128, 128>}, {pipeline_mode = #tpu.pipeline_mode<synchronous>, transform_indices = @transform_1, window_bounds = array<i64: 128, 896>}, {pipeline_mode = #tpu.pipeline_mode<synchronous>, transform_indices = @transform_2, window_bounds = array<i64: 1, 896>}, {pipeline_mode = #tpu.pipeline_mode<synchronous>, transform_indices = @transform_3, window_bounds = array<i64: 512, 128>}, {pipeline_mode = #tpu.pipeline_mode<synchronous>, transform_indices = @transform_4, window_bounds = array<i64: 1, 128>}, {pipeline_mode = #tpu.pipeline_mode<synchronous>, transform_indices = @transform_5, window_bounds = array<i64: 128, 128>}, {pipeline_mode = #tpu.pipeline_mode<synchronous>, transform_indices = @transform_6, window_bounds = array<i64: 1, 128>}, {pipeline_mode = #tpu.pipeline_mode<synchronous>, transform_indices = @transform_7, window_bounds = array<i64: 128, 128>}, {pipeline_mode = #tpu.pipeline_mode<synchronous>, transform_indices = @transform_8, window_bounds = array<i64: 1, 128>}, {transform_indices = @transform_9, window_bounds = array<i64: 128, 128>}]} {
    %c0 = arith.constant 0 : index
    %c0_0 = arith.constant 0 : index
    %0 = vector.load %arg1[%c0, %c0_0] : memref<128x128xbf16, #tpu.memory_space<vmem>>, vector<128x128xbf16>
    %c0_1 = arith.constant 0 : index
    %c0_2 = arith.constant 0 : index
    %1 = vector.load %arg2[%c0_1, %c0_2] : memref<128x896xbf16, #tpu.memory_space<vmem>>, vector<128x896xbf16>
    %cst = arith.constant dense<0.000000e+00> : vector<128x896xf32>
    %2 = tpu.matmul %0, %1, %cst {dimension_numbers = #tpu.dot_dimension_numbers<[1], [0], [0], [1], [0, 0, 1, 1], [], []>} : vector<128x128xbf16>, vector<128x896xbf16>, vector<128x896xf32> -> vector<128x896xf32>
    %c0_3 = arith.constant 0 : index
    %c0_4 = arith.constant 0 : index
    %3 = vector.load %arg3[%c0_3, %c0_4] : memref<1x896xf32, #tpu.memory_space<vmem>>, vector<1x896xf32>
    %4 = vector.broadcast %3 : vector<1x896xf32> to vector<128x896xf32>
    %5 = arith.addf %2, %4 : vector<128x896xf32>
    %cst_5 = arith.constant 0.000000e+00 : f32
    %6 = vector.broadcast %cst_5 : f32 to vector<128x896xf32>
    %7 = arith.maximumf %5, %6 : vector<128x896xf32>
    %8 = vector.extract_strided_slice %7 {offsets = [0, 0], sizes = [128, 384], strides = [1, 1]} : vector<128x896xf32> to vector<128x384xf32>
    %9 = vector.extract_strided_slice %7 {offsets = [0, 384], sizes = [128, 384], strides = [1, 1]} : vector<128x896xf32> to vector<128x384xf32>
    %10 = arith.maximumf %8, %9 : vector<128x384xf32>
    %11 = arith.truncf %10 : vector<128x384xf32> to vector<128x384xbf16>
    %c0_6 = arith.constant 0 : index
    %c0_7 = arith.constant 0 : index
    %12 = vector.load %arg11[%c0_6, %c0_7] : memref<128x512xbf16, #tpu.memory_space<vmem>>, vector<128x384xbf16>
    tpu.vector_store %arg11[%c0_6, %c0_7], %11 {strides = array<i32>} : memref<128x512xbf16, #tpu.memory_space<vmem>>, vector<128x384xbf16>,
    %13 = vector.extract_strided_slice %7 {offsets = [0, 768], sizes = [128, 128], strides = [1, 1]} : vector<128x896xf32> to vector<128x128xf32>
    %14 = arith.truncf %13 : vector<128x128xf32> to vector<128x128xbf16>
    %c0_8 = arith.constant 0 : index
    %c384 = arith.constant 384 : index
    %15 = vector.load %arg11[%c0_8, %c384] : memref<128x512xbf16, #tpu.memory_space<vmem>>, vector<128x128xbf16>
    tpu.vector_store %arg11[%c0_8, %c384], %14 {strides = array<i32>} : memref<128x512xbf16, #tpu.memory_space<vmem>>, vector<128x128xbf16>,
    %c0_9 = arith.constant 0 : index
    %c0_10 = arith.constant 0 : index
    %16 = vector.load %arg11[%c0_9, %c0_10] : memref<128x512xbf16, #tpu.memory_space<vmem>>, vector<128x512xbf16>
    %c0_11 = arith.constant 0 : index
    %c0_12 = arith.constant 0 : index
    %17 = vector.load %arg4[%c0_11, %c0_12] : memref<512x128xbf16, #tpu.memory_space<vmem>>, vector<512x128xbf16>
    %cst_13 = arith.constant dense<0.000000e+00> : vector<128x128xf32>
    %18 = tpu.matmul %16, %17, %cst_13 {dimension_numbers = #tpu.dot_dimension_numbers<[1], [0], [0], [1], [0, 0, 1, 1], [], []>} : vector<128x512xbf16>, vector<512x128xbf16>, vector<128x128xf32> -> vector<128x128xf32>
    %c0_14 = arith.constant 0 : index
    %c0_15 = arith.constant 0 : index
    %19 = vector.load %arg5[%c0_14, %c0_15] : memref<1x128xf32, #tpu.memory_space<vmem>>, vector<1x128xf32>
    %20 = vector.broadcast %19 : vector<1x128xf32> to vector<128x128xf32>
    %21 = arith.addf %18, %20 : vector<128x128xf32>
    %cst_16 = arith.constant 0.000000e+00 : f32
    %22 = vector.broadcast %cst_16 : f32 to vector<128x128xf32>
    %23 = arith.maximumf %21, %22 : vector<128x128xf32>
    %24 = arith.truncf %23 : vector<128x128xf32> to vector<128x128xbf16>
    %c0_17 = arith.constant 0 : index
    %c0_18 = arith.constant 0 : index
    %25 = vector.load %arg6[%c0_17, %c0_18] : memref<128x128xbf16, #tpu.memory_space<vmem>>, vector<128x128xbf16>
    %cst_19 = arith.constant dense<0.000000e+00> : vector<128x128xf32>
    %26 = tpu.matmul %24, %25, %cst_19 {dimension_numbers = #tpu.dot_dimension_numbers<[1], [0], [0], [1], [0, 0, 1, 1], [], []>} : vector<128x128xbf16>, vector<128x128xbf16>, vector<128x128xf32> -> vector<128x128xf32>
    %c0_20 = arith.constant 0 : index
    %c0_21 = arith.constant 0 : index
    %27 = vector.load %arg7[%c0_20, %c0_21] : memref<1x128xf32, #tpu.memory_space<vmem>>, vector<1x128xf32>
    %28 = vector.broadcast %27 : vector<1x128xf32> to vector<128x128xf32>
    %29 = arith.addf %26, %28 : vector<128x128xf32>
    %cst_22 = arith.constant 0.000000e+00 : f32
    %30 = vector.broadcast %cst_22 : f32 to vector<128x128xf32>
    %31 = arith.maximumf %29, %30 : vector<128x128xf32>
    %32 = arith.truncf %31 : vector<128x128xf32> to vector<128x128xbf16>
    %c0_23 = arith.constant 0 : index
    %c0_24 = arith.constant 0 : index
    %33 = vector.load %arg8[%c0_23, %c0_24] : memref<128x128xbf16, #tpu.memory_space<vmem>>, vector<128x128xbf16>
    %cst_25 = arith.constant dense<0.000000e+00> : vector<128x128xf32>
    %34 = tpu.matmul %32, %33, %cst_25 {dimension_numbers = #tpu.dot_dimension_numbers<[1], [0], [0], [1], [0, 0, 1, 1], [], []>} : vector<128x128xbf16>, vector<128x128xbf16>, vector<128x128xf32> -> vector<128x128xf32>
    %c0_26 = arith.constant 0 : index
    %c0_27 = arith.constant 0 : index
    %35 = vector.load %arg9[%c0_26, %c0_27] : memref<1x128xf32, #tpu.memory_space<vmem>>, vector<1x128xf32>
    %36 = vector.broadcast %35 : vector<1x128xf32> to vector<128x128xf32>
    %37 = arith.addf %34, %36 : vector<128x128xf32>
    %38 = arith.truncf %37 : vector<128x128xf32> to vector<128x128xbf16>
    %c0_28 = arith.constant 0 : index
    %c0_29 = arith.constant 0 : index
    %39 = vector.load %arg10[%c0_28, %c0_29] : memref<128x128xbf16, #tpu.memory_space<vmem>>, vector<128x128xbf16>
    tpu.vector_store %arg10[%c0_28, %c0_29], %38 {strides = array<i32>} : memref<128x128xbf16, #tpu.memory_space<vmem>>, vector<128x128xbf16>,
    return
  }
  func.func @transform_0(%arg0: i32) -> (i32, i32) {
    %c0_i32 = arith.constant 0 : i32
    %c0_i32_0 = arith.constant 0 : i32
    return %arg0, %c0_i32 : i32, i32
  }
  func.func @transform_1(%arg0: i32) -> (i32, i32) {
    %c0_i32 = arith.constant 0 : i32
    %c0_i32_0 = arith.constant 0 : i32
    %c0_i32_1 = arith.constant 0 : i32
    return %c0_i32, %c0_i32_0 : i32, i32
  }
  func.func @transform_2(%arg0: i32) -> (i32, i32) {
    %c0_i32 = arith.constant 0 : i32
    %c0_i32_0 = arith.constant 0 : i32
    %c0_i32_1 = arith.constant 0 : i32
    return %c0_i32, %c0_i32_0 : i32, i32
  }
  func.func @transform_3(%arg0: i32) -> (i32, i32) {
    %c0_i32 = arith.constant 0 : i32
    %c0_i32_0 = arith.constant 0 : i32
    %c0_i32_1 = arith.constant 0 : i32
    return %c0_i32, %c0_i32_0 : i32, i32
  }
  func.func @transform_4(%arg0: i32) -> (i32, i32) {
    %c0_i32 = arith.constant 0 : i32
    %c0_i32_0 = arith.constant 0 : i32
    %c0_i32_1 = arith.constant 0 : i32
    return %c0_i32, %c0_i32_0 : i32, i32
  }
  func.func @transform_5(%arg0: i32) -> (i32, i32) {
    %c0_i32 = arith.constant 0 : i32
    %c0_i32_0 = arith.constant 0 : i32
    %c0_i32_1 = arith.constant 0 : i32
    return %c0_i32, %c0_i32_0 : i32, i32
  }
  func.func @transform_6(%arg0: i32) -> (i32, i32) {
    %c0_i32 = arith.constant 0 : i32
    %c0_i32_0 = arith.constant 0 : i32
    %c0_i32_1 = arith.constant 0 : i32
    return %c0_i32, %c0_i32_0 : i32, i32
  }
  func.func @transform_7(%arg0: i32) -> (i32, i32) {
    %c0_i32 = arith.constant 0 : i32
    %c0_i32_0 = arith.constant 0 : i32
    %c0_i32_1 = arith.constant 0 : i32
    return %c0_i32, %c0_i32_0 : i32, i32
  }
  func.func @transform_8(%arg0: i32) -> (i32, i32) {
    %c0_i32 = arith.constant 0 : i32
    %c0_i32_0 = arith.constant 0 : i32
    %c0_i32_1 = arith.constant 0 : i32
    return %c0_i32, %c0_i32_0 : i32, i32
  }
  func.func @transform_9(%arg0: i32) -> (i32, i32) {
    %c0_i32 = arith.constant 0 : i32
    %c0_i32_0 = arith.constant 0 : i32
    return %arg0, %c0_i32 : i32, i32
  }
}

</mosaic_0001>

<llo_original>
// kernel: dgaze_forward_pallas.1
$region0: #{dgaze_forward_pallas.1}
  #allocation0 [shape = 'u32[]', space=smem, size = 0x4, offset = 0x4, fixed_abs, tag = 'smem constant byte address 0x4 - core index']
  #allocation1 [shape = 'u32[144,128]{1,0:T(1,128)}', space=vmem, size = 0x12000, scoped, tag = 'internal scratch']
  #allocation2 [shape = 'bf16[128,512]{1,0:T(8,128)(2,1)}', space=vmem, size = 0x20000, scoped, tag = 'scratch operand']
  %s0 = inlined_call_operand.vmem [shape: bf16[128,128], index: 0, kind: input, shape index: {}]
  %s1 = inlined_call_operand.hbm [shape: bf16[128,896], index: 1, kind: input, shape index: {}]
  %s2 = inlined_call_operand.vmem [shape: f32[1,896], index: 2, kind: input, shape index: {}]
  %s3 = inlined_call_operand.hbm [shape: bf16[512,128], index: 3, kind: input, shape index: {}]
  %s4 = inlined_call_operand.vmem [shape: f32[1,128], index: 4, kind: input, shape index: {}]
  %s5 = inlined_call_operand.vmem [shape: bf16[128,128], index: 5, kind: input, shape index: {}]
  %s6 = inlined_call_operand.vmem [shape: f32[1,128], index: 6, kind: input, shape index: {}]
  %s7 = inlined_call_operand.vmem [shape: bf16[128,128], index: 7, kind: input, shape index: {}]
  %s8 = inlined_call_operand.vmem [shape: f32[1,128], index: 8, kind: input, shape index: {}]
  %s9 = inlined_call_operand.vmem [shape: bf16[128,128], index: 9, kind: output, shape index: {}]
  %s10 = sld [smem:[#allocation0]]
  $region54: #{dgaze_forward_pallas.1} parent=0
    _
  %s12 = ssub.s32 1, %s10
  %s13 = scalar_select 0, %s12, %s10
  $region1: #{dgaze_forward_pallas.1} parent=0
    #allocation3 [shape = 'u8[229376]{0}', space=vmem, size = 0x38000, scoped, tag = 'input window, operand 1, single buffered']
    #allocation4 [shape = 's32[1]{0}', space=sflag, size = 0x4, scoped, tag = 'scoped memory for dgaze_forward_pallas.1']
    #allocation5 [shape = 'u8[131072]{0}', space=vmem, size = 0x20000, scoped, tag = 'input window, operand 3, single buffered']
    #allocation6 [shape = 's32[1]{0}', space=sflag, size = 0x4, scoped, tag = 'scoped memory for dgaze_forward_pallas.1']
    %14 = vsyncpa [#allocation4], 0
    %15 = vsyncpa [#allocation6], 0
    // Predicated region
    $region2: #{dgaze_forward_pallas.1} parent=1 // pred_check
      _
    $region3: #{dgaze_forward_pallas.1} parent=1 // pred_check_branch
      %17 = sbr.rel (0) target = $region5
    $region4: #{dgaze_forward_pallas.1} parent=1 // pred_region
      _
    $region5: #{dgaze_forward_pallas.1} parent=1 // pred_fallthru
      _
    // Predicated region
    $region6: #{dgaze_forward_pallas.1} parent=1 // pred_check
      _
    $region7: #{dgaze_forward_pallas.1} parent=1 // pred_check_branch
      %19 = sbr.rel (0) target = $region9
    $region8: #{dgaze_forward_pallas.1} parent=1 // pred_region
      %s21 = ssub.s32 7168, 7168
      %22 = vsyncadd [#allocation4], %s21
      %s23 = sshll.u32 [#allocation3], 4
      %s24 = int_to_ptr.vmem [resolvable:$true] %s23
      %29 = dma.hbm_to_vmem [thread:$0]  %s1, 7168, %s24, [#allocation4], 448, 448, 28
    $region9: #{dgaze_forward_pallas.1} parent=1 // pred_fallthru
      _
    // Predicated region
    $region10: #{dgaze_forward_pallas.1} parent=1 // pred_check
      _
    $region11: #{dgaze_forward_pallas.1} parent=1 // pred_check_branch
      %31 = sbr.rel (0) target = $region13
    $region12: #{dgaze_forward_pallas.1} parent=1 // pred_region
      _
    $region13: #{dgaze_forward_pallas.1} parent=1 // pred_fallthru
      _
    // Predicated region
    $region14: #{dgaze_forward_pallas.1} parent=1 // pred_check
      _
    $region15: #{dgaze_forward_pallas.1} parent=1 // pred_check_branch
      %33 = sbr.rel (0) target = $region17
    $region16: #{dgaze_forward_pallas.1} parent=1 // pred_region
      %s35 = ssub.s32 4096, 4096
      %36 = vsyncadd [#allocation6], %s35
      %s37 = sshll.u32 [#allocation5], 4
      %s38 = int_to_ptr.vmem [resolvable:$true] %s37
      %43 = dma.hbm_to_vmem [thread:$0]  %s3, 4096, %s38, [#allocation6], 64, 64, 4
    $region17: #{dgaze_forward_pallas.1} parent=1 // pred_fallthru
      _
    // Predicated region
    $region18: #{dgaze_forward_pallas.1} parent=1 // pred_check
      _
    $region19: #{dgaze_forward_pallas.1} parent=1 // pred_check_branch
      %45 = sbr.rel (0) target = $region21
    $region20: #{dgaze_forward_pallas.1} parent=1 // pred_region
      _
    $region21: #{dgaze_forward_pallas.1} parent=1 // pred_fallthru
      _
    // Predicated region
    $region22: #{dgaze_forward_pallas.1} parent=1 // pred_check
      _
    $region23: #{dgaze_forward_pallas.1} parent=1 // pred_check_branch
      %47 = sbr.rel (0) target = $region25
    $region24: #{dgaze_forward_pallas.1} parent=1 // pred_region
      _
    $region25: #{dgaze_forward_pallas.1} parent=1 // pred_fallthru
      _
    // Predicated region
    $region26: #{dgaze_forward_pallas.1} parent=1 // pred_check
      _
    $region27: #{dgaze_forward_pallas.1} parent=1 // pred_check_branch
      %49 = sbr.rel (0) target = $region29
    $region28: #{dgaze_forward_pallas.1} parent=1 // pred_region
      _
    $region29: #{dgaze_forward_pallas.1} parent=1 // pred_fallthru
      _
    // Predicated region
    $region30: #{dgaze_forward_pallas.1} parent=1 // pred_check
      _
    $region31: #{dgaze_forward_pallas.1} parent=1 // pred_check_branch
      %51 = sbr.rel (0) target = $region33
    $region32: #{dgaze_forward_pallas.1} parent=1 // pred_region
      _
    $region33: #{dgaze_forward_pallas.1} parent=1 // pred_fallthru
      _
    // Predicated region
    $region34: #{dgaze_forward_pallas.1} parent=1 // pred_check
      _
    $region35: #{dgaze_forward_pallas.1} parent=1 // pred_check_branch
      %53 = sbr.rel (0) target = $region37
    $region36: #{dgaze_forward_pallas.1} parent=1 // pred_region
      _
    $region37: #{dgaze_forward_pallas.1} parent=1 // pred_fallthru
      _
    // Predicated region
    $region38: #{dgaze_forward_pallas.1} parent=1 // pred_check
      _
    $region39: #{dgaze_forward_pallas.1} parent=1 // pred_check_branch
      %55 = sbr.rel (0) target = $region41
    $region40: #{dgaze_forward_pallas.1} parent=1 // pred_region
      %56 = dma.done [#allocation4], 7168
    $region41: #{dgaze_forward_pallas.1} parent=1 // pred_fallthru
      _
    // Predicated region
    $region42: #{dgaze_forward_pallas.1} parent=1 // pred_check
      _
    $region43: #{dgaze_forward_pallas.1} parent=1 // pred_check_branch
      %58 = sbr.rel (0) target = $region45
    $region44: #{dgaze_forward_pallas.1} parent=1 // pred_region
      %59 = dma.done [#allocation6], 4096
    $region45: #{dgaze_forward_pallas.1} parent=1 // pred_fallthru
      _
    %v61 = vld [vmem:[%s0] sm:$0xf]
    %v62 = vld [vmem:[%s0 + $0x4] sm:$0xf]
    %v63 = vld [vmem:[%s0 + $0x8] sm:$0xf]
    %v64 = vld [vmem:[%s0 + $0xc] sm:$0xf]
    %v65 = vld [vmem:[%s0 + $0x10] sm:$0xf]
    %v66 = vld [vmem:[%s0 + $0x14] sm:$0xf]
    %v67 = vld [vmem:[%s0 + $0x18] sm:$0xf]
    %v68 = vld [vmem:[%s0 + $0x1c] sm:$0xf]
    %v69 = vld [vmem:[%s0 + $0x20] sm:$0xf]
    %v70 = vld [vmem:[%s0 + $0x24] sm:$0xf]
    %v71 = vld [vmem:[%s0 + $0x28] sm:$0xf]
    %v72 = vld [vmem:[%s0 + $0x2c] sm:$0xf]
    %v73 = vld [vmem:[%s0 + $0x30] sm:$0xf]
    %v74 = vld [vmem:[%s0 + $0x34] sm:$0xf]
    %v75 = vld [vmem:[%s0 + $0x38] sm:$0xf]
    %v76 = vld [vmem:[%s0 + $0x3c] sm:$0xf]
    %v77 = vld [vmem:[#allocation3] sm:$0xff]
    %v78 = vld [vmem:[#allocation3 + $0x8] sm:$0xff]
    %v79 = vld [vmem:[#allocation3 + $0x10] sm:$0xff]
    %v80 = vld [vmem:[#allocation3 + $0x18] sm:$0xf]
    %v81 = vld [vmem:[#allocation3 + $0x1c] sm:$0xff]
    %v82 = vld [vmem:[#allocation3 + $0x24] sm:$0xff]
    %v83 = vld [vmem:[#allocation3 + $0x2c] sm:$0xff]
    %v84 = vld [vmem:[#allocation3 + $0x34] sm:$0xf]
    %v85 = vld [vmem:[#allocation3 + $0x38] sm:$0xff]
    %v86 = vld [vmem:[#allocation3 + $0x40] sm:$0xff]
    %v87 = vld [vmem:[#allocation3 + $0x48] sm:$0xff]
    %v88 = vld [vmem:[#allocation3 + $0x50] sm:$0xf]
    %v89 = vld [vmem:[#allocation3 + $0x54] sm:$0xff]
    %v90 = vld [vmem:[#allocation3 + $0x5c] sm:$0xff]
    %v91 = vld [vmem:[#allocation3 + $0x64] sm:$0xff]
    %v92 = vld [vmem:[#allocation3 + $0x6c] sm:$0xf]
    %v93 = vld [vmem:[#allocation3 + $0x70] sm:$0xff]
    %v94 = vld [vmem:[#allocation3 + $0x78] sm:$0xff]
    %v95 = vld [vmem:[#allocation3 + $0x80] sm:$0xff]
    %v96 = vld [vmem:[#allocation3 + $0x88] sm:$0xf]
    %v97 = vld [vmem:[#allocation3 + $0x8c] sm:$0xff]
    %v98 = vld [vmem:[#allocation3 + $0x94] sm:$0xff]
    %v99 = vld [vmem:[#allocation3 + $0x9c] sm:$0xff]
    %v100 = vld [vmem:[#allocation3 + $0xa4] sm:$0xf]
    %v101 = vld [vmem:[#allocation3 + $0xa8] sm:$0xff]
    %v102 = vld [vmem:[#allocation3 + $0xb0] sm:$0xff]
    %v103 = vld [vmem:[#allocation3 + $0xb8] sm:$0xff]
    %v104 = vld [vmem:[#allocation3 + $0xc0] sm:$0xf]
    %v105 = vld [vmem:[#allocation3 + $0xc4] sm:$0xff]
    %v106 = vld [vmem:[#allocation3 + $0xcc] sm:$0xff]
    %v107 = vld [vmem:[#allocation3 + $0xd4] sm:$0xff]
    %v108 = vld [vmem:[#allocation3 + $0xdc] sm:$0xf]
    %v109 = vld [vmem:[#allocation3 + $0xe0] sm:$0xff]
    %v110 = vld [vmem:[#allocation3 + $0xe8] sm:$0xff]
    %v111 = vld [vmem:[#allocation3 + $0xf0] sm:$0xff]
    %v112 = vld [vmem:[#allocation3 + $0xf8] sm:$0xf]
    %v113 = vld [vmem:[#allocation3 + $0xfc] sm:$0xff]
    %v114 = vld [vmem:[#allocation3 + $0x104] sm:$0xff]
    %v115 = vld [vmem:[#allocation3 + $0x10c] sm:$0xff]
    %v116 = vld [vmem:[#allocation3 + $0x114] sm:$0xf]
    %v117 = vld [vmem:[#allocation3 + $0x118] sm:$0xff]
    %v118 = vld [vmem:[#allocation3 + $0x120] sm:$0xff]
    %v119 = vld [vmem:[#allocation3 + $0x128] sm:$0xff]
    %v120 = vld [vmem:[#allocation3 + $0x130] sm:$0xf]
    %v121 = vld [vmem:[#allocation3 + $0x134] sm:$0xff]
    %v122 = vld [vmem:[#allocation3 + $0x13c] sm:$0xff]
    %v123 = vld [vmem:[#allocation3 + $0x144] sm:$0xff]
    %v124 = vld [vmem:[#allocation3 + $0x14c] sm:$0xf]
    %v125 = vld [vmem:[#allocation3 + $0x150] sm:$0xff]
    %v126 = vld [vmem:[#allocation3 + $0x158] sm:$0xff]
    %v127 = vld [vmem:[#allocation3 + $0x160] sm:$0xff]
    %v128 = vld [vmem:[#allocation3 + $0x168] sm:$0xf]
    %v129 = vld [vmem:[#allocation3 + $0x16c] sm:$0xff]
    %v130 = vld [vmem:[#allocation3 + $0x174] sm:$0xff]
    %v131 = vld [vmem:[#allocation3 + $0x17c] sm:$0xff]
    %v132 = vld [vmem:[#allocation3 + $0x184] sm:$0xf]
    %v133 = vld [vmem:[#allocation3 + $0x188] sm:$0xff]
    %v134 = vld [vmem:[#allocation3 + $0x190] sm:$0xff]
    %v135 = vld [vmem:[#allocation3 + $0x198] sm:$0xff]
    %v136 = vld [vmem:[#allocation3 + $0x1a0] sm:$0xf]
    %v137 = vld [vmem:[#allocation3 + $0x1a4] sm:$0xff]
    %v138 = vld [vmem:[#allocation3 + $0x1ac] sm:$0xff]
    %v139 = vld [vmem:[#allocation3 + $0x1b4] sm:$0xff]
    %v140 = vld [vmem:[#allocation3 + $0x1bc] sm:$0xf]
    %v141 = vld [vmem:[%s2] sm:$0xff]
    %v143 = vlaneseq
    %v144 = vshrl.u32 %v143, 7
    %v145 = vsub.s32 0, %v144
    %v146 = vrot.slane %v141, %v145
    %v147 = vlaneseq
    %v148 = vshrl.u32 %v147, 7
    %v149 = vsub.s32 1, %v148
    %v150 = vrot.slane %v141, %v149
    %v151 = vlaneseq
    %v152 = vshrl.u32 %v151, 7
    %v153 = vsub.s32 2, %v152
    %v154 = vrot.slane %v141, %v153
    %v155 = vlaneseq
    %v156 = vshrl.u32 %v155, 7
    %v157 = vsub.s32 3, %v156
    %v158 = vrot.slane %v141, %v157
    %v159 = vlaneseq
    %v160 = vshrl.u32 %v159, 7
    %v161 = vsub.s32 4, %v160
    %v162 = vrot.slane %v141, %v161
    %v163 = vlaneseq
    %v164 = vshrl.u32 %v163, 7
    %v165 = vsub.s32 5, %v164
    %v166 = vrot.slane %v141, %v165
    %v167 = vlaneseq
    %v168 = vshrl.u32 %v167, 7
    %v169 = vsub.s32 6, %v168
    %v170 = vrot.slane %v141, %v169
    %v194 = vunpack.c.l.b16 %v61
    %v195 = vunpack.c.l.b16 %v62
    %v196 = vunpack.c.l.b16 %v63
    %v197 = vunpack.c.l.b16 %v64
    %v198 = vunpack.c.l.b16 %v65
    %v199 = vunpack.c.l.b16 %v66
    %v200 = vunpack.c.l.b16 %v67
    %v201 = vunpack.c.l.b16 %v68
    %v202 = vunpack.c.l.b16 %v69
    %v203 = vunpack.c.l.b16 %v70
    %v204 = vunpack.c.l.b16 %v71
    %v205 = vunpack.c.l.b16 %v72
    %v206 = vunpack.c.l.b16 %v73
    %v207 = vunpack.c.l.b16 %v74
    %v208 = vunpack.c.l.b16 %v75
    %v209 = vunpack.c.l.b16 %v76
    %v210 = vpack.c.b16 %v195, %v194
    %v211 = vpack.c.b16 %v197, %v196
    %v212 = vpack.c.b16 %v199, %v198
    %v213 = vpack.c.b16 %v201, %v200
    %v214 = vpack.c.b16 %v203, %v202
    %v215 = vpack.c.b16 %v205, %v204
    %v216 = vpack.c.b16 %v207, %v206
    %v217 = vpack.c.b16 %v209, %v208
    %v290 = vunpack.c.l.b16 %v77
    %v291 = vunpack.c.h.b16 %v77
    %v292 = vunpack.c.l.b16 %v78
    %v293 = vunpack.c.h.b16 %v78
    %v294 = vunpack.c.l.b16 %v79
    %v295 = vunpack.c.h.b16 %v79
    %v296 = vunpack.c.l.b16 %v80
    %v297 = vunpack.c.l.b16 %v81
    %v298 = vunpack.c.h.b16 %v81
    %v299 = vunpack.c.l.b16 %v82
    %v300 = vunpack.c.h.b16 %v82
    %v301 = vunpack.c.l.b16 %v83
    %v302 = vunpack.c.h.b16 %v83
    %v303 = vunpack.c.l.b16 %v84
    %v304 = vunpack.c.l.b16 %v85
    %v305 = vunpack.c.h.b16 %v85
    %v306 = vunpack.c.l.b16 %v86
    %v307 = vunpack.c.h.b16 %v86
    %v308 = vunpack.c.l.b16 %v87
    %v309 = vunpack.c.h.b16 %v87
    %v310 = vunpack.c.l.b16 %v88
    %v311 = vunpack.c.l.b16 %v89
    %v312 = vunpack.c.h.b16 %v89
    %v313 = vunpack.c.l.b16 %v90
    %v314 = vunpack.c.h.b16 %v90
    %v315 = vunpack.c.l.b16 %v91
    %v316 = vunpack.c.h.b16 %v91
    %v317 = vunpack.c.l.b16 %v92
    %v318 = vunpack.c.l.b16 %v93
    %v319 = vunpack.c.h.b16 %v93
    %v320 = vunpack.c.l.b16 %v94
    %v321 = vunpack.c.h.b16 %v94
    %v322 = vunpack.c.l.b16 %v95
    %v323 = vunpack.c.h.b16 %v95
    %v324 = vunpack.c.l.b16 %v96
    %v325 = vunpack.c.l.b16 %v97
    %v326 = vunpack.c.h.b16 %v97
    %v327 = vunpack.c.l.b16 %v98
    %v328 = vunpack.c.h.b16 %v98
    %v329 = vunpack.c.l.b16 %v99
    %v330 = vunpack.c.h.b16 %v99
    %v331 = vunpack.c.l.b16 %v100
    %v332 = vunpack.c.l.b16 %v101
    %v333 = vunpack.c.h.b16 %v101
    %v334 = vunpack.c.l.b16 %v102
    %v335 = vunpack.c.h.b16 %v102
    %v336 = vunpack.c.l.b16 %v103
    %v337 = vunpack.c.h.b16 %v103
    %v338 = vunpack.c.l.b16 %v104
    %v339 = vunpack.c.l.b16 %v105
    %v340 = vunpack.c.h.b16 %v105
    %v341 = vunpack.c.l.b16 %v106
    %v342 = vunpack.c.h.b16 %v106
    %v343 = vunpack.c.l.b16 %v107
    %v344 = vunpack.c.h.b16 %v107
    %v345 = vunpack.c.l.b16 %v108
    %v346 = vunpack.c.l.b16 %v109
    %v347 = vunpack.c.h.b16 %v109
    %v348 = vunpack.c.l.b16 %v110
    %v349 = vunpack.c.h.b16 %v110
    %v350 = vunpack.c.l.b16 %v111
    %v351 = vunpack.c.h.b16 %v111
    %v352 = vunpack.c.l.b16 %v112
    %v353 = vunpack.c.l.b16 %v113
    %v354 = vunpack.c.h.b16 %v113
    %v355 = vunpack.c.l.b16 %v114
    %v356 = vunpack.c.h.b16 %v114
    %v357 = vunpack.c.l.b16 %v115
    %v358 = vunpack.c.h.b16 %v115
    %v359 = vunpack.c.l.b16 %v116
    %v360 = vunpack.c.l.b16 %v117
    %v361 = vunpack.c.h.b16 %v117
    %v362 = vunpack.c.l.b16 %v118
    %v363 = vunpack.c.h.b16 %v118
    %v364 = vunpack.c.l.b16 %v119
    %v365 = vunpack.c.h.b16 %v119
    %v366 = vunpack.c.l.b16 %v120
    %v367 = vunpack.c.l.b16 %v121
    %v368 = vunpack.c.h.b16 %v121
    %v369 = vunpack.c.l.b16 %v122
    %v370 = vunpack.c.h.b16 %v122
    %v371 = vunpack.c.l.b16 %v123
    %v372 = vunpack.c.h.b16 %v123
    %v373 = vunpack.c.l.b16 %v124
    %v374 = vunpack.c.l.b16 %v125
    %v375 = vunpack.c.h.b16 %v125
    %v376 = vunpack.c.l.b16 %v126
    %v377 = vunpack.c.h.b16 %v126
    %v378 = vunpack.c.l.b16 %v127
    %v379 = vunpack.c.h.b16 %v127
    %v380 = vunpack.c.l.b16 %v128
    %v381 = vunpack.c.l.b16 %v129
    %v382 = vunpack.c.h.b16 %v129
    %v383 = vunpack.c.l.b16 %v130
    %v384 = vunpack.c.h.b16 %v130
    %v385 = vunpack.c.l.b16 %v131
    %v386 = vunpack.c.h.b16 %v131
    %v387 = vunpack.c.l.b16 %v132
    %v388 = vunpack.c.l.b16 %v133
    %v389 = vunpack.c.h.b16 %v133
    %v390 = vunpack.c.l.b16 %v134
    %v391 = vunpack.c.h.b16 %v134
    %v392 = vunpack.c.l.b16 %v135
    %v393 = vunpack.c.h.b16 %v135
    %v394 = vunpack.c.l.b16 %v136
    %v395 = vunpack.c.l.b16 %v137
    %v396 = vunpack.c.h.b16 %v137
    %v397 = vunpack.c.l.b16 %v138
    %v398 = vunpack.c.h.b16 %v138
    %v399 = vunpack.c.l.b16 %v139
    %v400 = vunpack.c.h.b16 %v139
    %v401 = vunpack.c.l.b16 %v140
    %v402 = vpack.c.b16 %v297, %v290
    %v403 = vpack.c.b16 %v298, %v291
    %v404 = vpack.c.b16 %v299, %v292
    %v405 = vpack.c.b16 %v300, %v293
    %v406 = vpack.c.b16 %v301, %v294
    %v407 = vpack.c.b16 %v302, %v295
    %v408 = vpack.c.b16 %v303, %v296
    %v409 = vpack.c.b16 %v311, %v304
    %v410 = vpack.c.b16 %v312, %v305
    %v411 = vpack.c.b16 %v313, %v306
    %v412 = vpack.c.b16 %v314, %v307
    %v413 = vpack.c.b16 %v315, %v308
    %v414 = vpack.c.b16 %v316, %v309
    %v415 = vpack.c.b16 %v317, %v310
    %v416 = vpack.c.b16 %v325, %v318
    %v417 = vpack.c.b16 %v326, %v319
    %v418 = vpack.c.b16 %v327, %v320
    %v419 = vpack.c.b16 %v328, %v321
    %v420 = vpack.c.b16 %v329, %v322
    %v421 = vpack.c.b16 %v330, %v323
    %v422 = vpack.c.b16 %v331, %v324
    %v423 = vpack.c.b16 %v339, %v332
    %v424 = vpack.c.b16 %v340, %v333
    %v425 = vpack.c.b16 %v341, %v334
    %v426 = vpack.c.b16 %v342, %v335
    %v427 = vpack.c.b16 %v343, %v336
    %v428 = vpack.c.b16 %v344, %v337
    %v429 = vpack.c.b16 %v345, %v338
    %v430 = vpack.c.b16 %v353, %v346
    %v431 = vpack.c.b16 %v354, %v347
    %v432 = vpack.c.b16 %v355, %v348
    %v433 = vpack.c.b16 %v356, %v349
    %v434 = vpack.c.b16 %v357, %v350
    %v435 = vpack.c.b16 %v358, %v351
    %v436 = vpack.c.b16 %v359, %v352
    %v437 = vpack.c.b16 %v367, %v360
    %v438 = vpack.c.b16 %v368, %v361
    %v439 = vpack.c.b16 %v369, %v362
    %v440 = vpack.c.b16 %v370, %v363
    %v441 = vpack.c.b16 %v371, %v364
    %v442 = vpack.c.b16 %v372, %v365
    %v443 = vpack.c.b16 %v373, %v366
    %v444 = vpack.c.b16 %v381, %v374
    %v445 = vpack.c.b16 %v382, %v375
    %v446 = vpack.c.b16 %v383, %v376
    %v447 = vpack.c.b16 %v384, %v377
    %v448 = vpack.c.b16 %v385, %v378
    %v449 = vpack.c.b16 %v386, %v379
    %v450 = vpack.c.b16 %v387, %v380
    %v451 = vpack.c.b16 %v395, %v388
    %v452 = vpack.c.b16 %v396, %v389
    %v453 = vpack.c.b16 %v397, %v390
    %v454 = vpack.c.b16 %v398, %v391
    %v455 = vpack.c.b16 %v399, %v392
    %v456 = vpack.c.b16 %v400, %v393
    %v457 = vpack.c.b16 %v401, %v394
    %514 = vmatprep.subr.bf16.mxu0 %v452
    %515 = vmatpush1.bf16.msra.mxu0 %v451
    %516 = vmatprep.subr.bf16.mxu0 %v445
    %517 = vmatpush1.bf16.msra.mxu0 %v444
    %518 = vmatprep.subr.bf16.mxu0 %v438
    %519 = vmatpush1.bf16.msra.mxu0 %v437
    %520 = vmatprep.subr.bf16.mxu0 %v431
    %521 = vmatpush1.bf16.msra.mxu0 %v430
    %522 = vmatprep.subr.bf16.mxu0 %v424
    %523 = vmatpush1.bf16.msra.mxu0 %v423
    %524 = vmatprep.subr.bf16.mxu0 %v417
    %525 = vmatpush1.bf16.msra.mxu0 %v416
    %526 = vmatprep.subr.bf16.mxu0 %v410
    %527 = vmatpush1.bf16.msra.mxu0 %v409
    %528 = vmatprep.subr.bf16.mxu0 %v403
    %529 = vmatpush1.bf16.msra.mxu0 %v402
    %530 = vmatprep.subr.bf16.mxu0 0
    %531 = vmatpush2.bf16.msra.mxu0 0
    %532 = vmatprep.subr.bf16.mxu0 0
    %533 = vmatpush2.bf16.msra.mxu0 0
    %534 = vmatprep.subr.bf16.mxu0 0
    %535 = vmatpush2.bf16.msra.mxu0 0
    %536 = vmatprep.subr.bf16.mxu0 0
    %537 = vmatpush2.bf16.msra.mxu0 0
    %538 = vmatprep.subr.bf16.mxu0 0
    %539 = vmatpush2.bf16.msra.mxu0 0
    %540 = vmatprep.subr.bf16.mxu0 0
    %541 = vmatpush2.bf16.msra.mxu0 0
    %542 = vmatprep.subr.bf16.mxu0 0
    %543 = vmatpush2.bf16.msra.mxu0 0
    %544 = vmatprep.subr.bf16.mxu0 0
    %545 = vmatpush2.bf16.msra.mxu0 0
    %546 = vmatprep.mubr.bf16.mxu0 0
    %547 = vmatmul.mubr.bf16.gmra.mxu0 %v210
    %v548 = vpop.f32.mrf.mxu0
    %v549 = vadd.f32 %v146, %v548
    %v550 = vpop.f32.mrf.mxu0
    %v551 = vadd.f32 %v150, %v550
    %v552 = vpop.f32.mrf.mxu0
    %v553 = vadd.f32 %v146, %v552
    %v554 = vpop.f32.mrf.mxu0
    %v555 = vadd.f32 %v150, %v554
    %556 = vmatprep.mubr.bf16.mxu0 0
    %557 = vmatmul.mubr.bf16.gmra.mxu0 %v211
    %v558 = vpop.f32.mrf.mxu0
    %v559 = vadd.f32 %v146, %v558
    %v560 = vpop.f32.mrf.mxu0
    %v561 = vadd.f32 %v150, %v560
    %v562 = vpop.f32.mrf.mxu0
    %v563 = vadd.f32 %v146, %v562
    %v564 = vpop.f32.mrf.mxu0
    %v565 = vadd.f32 %v150, %v564
    %566 = vmatprep.mubr.bf16.mxu0 0
    %567 = vmatmul.mubr.bf16.gmra.mxu0 %v212
    %v568 = vpop.f32.mrf.mxu0
    %v569 = vadd.f32 %v146, %v568
    %v570 = vpop.f32.mrf.mxu0
    %v571 = vadd.f32 %v150, %v570
    %v572 = vpop.f32.mrf.mxu0
    %v573 = vadd.f32 %v146, %v572
    %v574 = vpop.f32.mrf.mxu0
    %v575 = vadd.f32 %v150, %v574
    %576 = vmatprep.mubr.bf16.mxu0 0
    %577 = vmatmul.mubr.bf16.gmra.mxu0 %v213
    %v578 = vpop.f32.mrf.mxu0
    %v579 = vadd.f32 %v146, %v578
    %v580 = vpop.f32.mrf.mxu0
    %v581 = vadd.f32 %v150, %v580
    %v582 = vpop.f32.mrf.mxu0
    %v583 = vadd.f32 %v146, %v582
    %v584 = vpop.f32.mrf.mxu0
    %v585 = vadd.f32 %v150, %v584
    %586 = vmatprep.mubr.bf16.mxu0 0
    %587 = vmatmul.mubr.bf16.gmra.mxu0 %v214
    %v588 = vpop.f32.mrf.mxu0
    %v589 = vadd.f32 %v146, %v588
    %v590 = vpop.f32.mrf.mxu0
    %v591 = vadd.f32 %v150, %v590
    %v592 = vpop.f32.mrf.mxu0
    %v593 = vadd.f32 %v146, %v592
    %v594 = vpop.f32.mrf.mxu0
    %v595 = vadd.f32 %v150, %v594
    %596 = vmatprep.mubr.bf16.mxu0 0
    %597 = vmatmul.mubr.bf16.gmra.mxu0 %v215
    %v598 = vpop.f32.mrf.mxu0
    %v599 = vadd.f32 %v146, %v598
    %v600 = vpop.f32.mrf.mxu0
    %v601 = vadd.f32 %v150, %v600
    %v602 = vpop.f32.mrf.mxu0
    %v603 = vadd.f32 %v146, %v602
    %v604 = vpop.f32.mrf.mxu0
    %v605 = vadd.f32 %v150, %v604
    %606 = vmatprep.mubr.bf16.mxu0 0
    %607 = vmatmul.mubr.bf16.gmra.mxu0 %v216
    %v608 = vpop.f32.mrf.mxu0
    %v609 = vadd.f32 %v146, %v608
    %v610 = vpop.f32.mrf.mxu0
    %v611 = vadd.f32 %v150, %v610
    %v612 = vpop.f32.mrf.mxu0
    %v613 = vadd.f32 %v146, %v612
    %v614 = vpop.f32.mrf.mxu0
    %v615 = vadd.f32 %v150, %v614
    %616 = vmatprep.mubr.bf16.mxu0 0
    %617 = vmatmul.mubr.bf16.gmra.mxu0 %v217
    %v618 = vpop.f32.mrf.mxu0
    %v619 = vadd.f32 %v146, %v618
    %v620 = vpop.f32.mrf.mxu0
    %v621 = vadd.f32 %v150, %v620
    %v622 = vpop.f32.mrf.mxu0
    %v623 = vadd.f32 %v146, %v622
    %v624 = vpop.f32.mrf.mxu0
    %v625 = vadd.f32 %v150, %v624
    %626 = vdwg.mxu0
    %627 = vmatprep.subr.bf16.mxu0 %v454
    %628 = vmatpush1.bf16.msra.mxu0 %v453
    %629 = vmatprep.subr.bf16.mxu0 %v447
    %630 = vmatpush1.bf16.msra.mxu0 %v446
    %631 = vmatprep.subr.bf16.mxu0 %v440
    %632 = vmatpush1.bf16.msra.mxu0 %v439
    %633 = vmatprep.subr.bf16.mxu0 %v433
    %634 = vmatpush1.bf16.msra.mxu0 %v432
    %635 = vmatprep.subr.bf16.mxu0 %v426
    %636 = vmatpush1.bf16.msra.mxu0 %v425
    %637 = vmatprep.subr.bf16.mxu0 %v419
    %638 = vmatpush1.bf16.msra.mxu0 %v418
    %639 = vmatprep.subr.bf16.mxu0 %v412
    %640 = vmatpush1.bf16.msra.mxu0 %v411
    %641 = vmatprep.subr.bf16.mxu0 %v405
    %642 = vmatpush1.bf16.msra.mxu0 %v404
    %643 = vmatprep.subr.bf16.mxu0 0
    %644 = vmatpush2.bf16.msra.mxu0 0
    %645 = vmatprep.subr.bf16.mxu0 0
    %646 = vmatpush2.bf16.msra.mxu0 0
    %647 = vmatprep.subr.bf16.mxu0 0
    %648 = vmatpush2.bf16.msra.mxu0 0
    %649 = vmatprep.subr.bf16.mxu0 0
    %650 = vmatpush2.bf16.msra.mxu0 0
    %651 = vmatprep.subr.bf16.mxu0 0
    %652 = vmatpush2.bf16.msra.mxu0 0
    %653 = vmatprep.subr.bf16.mxu0 0
    %654 = vmatpush2.bf16.msra.mxu0 0
    %655 = vmatprep.subr.bf16.mxu0 0
    %656 = vmatpush2.bf16.msra.mxu0 0
    %657 = vmatprep.subr.bf16.mxu0 0
    %658 = vmatpush2.bf16.msra.mxu0 0
    %659 = vmatprep.mubr.bf16.mxu0 0
    %660 = vmatmul.mubr.bf16.gmra.mxu0 %v210
    %v661 = vpop.f32.mrf.mxu0
    %v662 = vadd.f32 %v154, %v661
    %v663 = vpop.f32.mrf.mxu0
    %v664 = vadd.f32 %v158, %v663
    %v665 = vpop.f32.mrf.mxu0
    %v666 = vadd.f32 %v154, %v665
    %v667 = vpop.f32.mrf.mxu0
    %v668 = vadd.f32 %v158, %v667
    %669 = vmatprep.mubr.bf16.mxu0 0
    %670 = vmatmul.mubr.bf16.gmra.mxu0 %v211
    %v671 = vpop.f32.mrf.mxu0
    %v672 = vadd.f32 %v154, %v671
    %v673 = vpop.f32.mrf.mxu0
    %v674 = vadd.f32 %v158, %v673
    %v675 = vpop.f32.mrf.mxu0
    %v676 = vadd.f32 %v154, %v675
    %v677 = vpop.f32.mrf.mxu0
    %v678 = vadd.f32 %v158, %v677
    %679 = vmatprep.mubr.bf16.mxu0 0
    %680 = vmatmul.mubr.bf16.gmra.mxu0 %v212
    %v681 = vpop.f32.mrf.mxu0
    %v682 = vadd.f32 %v154, %v681
    %v683 = vpop.f32.mrf.mxu0
    %v684 = vadd.f32 %v158, %v683
    %v685 = vpop.f32.mrf.mxu0
    %v686 = vadd.f32 %v154, %v685
    %v687 = vpop.f32.mrf.mxu0
    %v688 = vadd.f32 %v158, %v687
    %689 = vmatprep.mubr.bf16.mxu0 0
    %690 = vmatmul.mubr.bf16.gmra.mxu0 %v213
    %v691 = vpop.f32.mrf.mxu0
    %v692 = vadd.f32 %v154, %v691
    %v693 = vpop.f32.mrf.mxu0
    %v694 = vadd.f32 %v158, %v693
    %v695 = vpop.f32.mrf.mxu0
    %v696 = vadd.f32 %v154, %v695
    %v697 = vpop.f32.mrf.mxu0
    %v698 = vadd.f32 %v158, %v697
    %699 = vmatprep.mubr.bf16.mxu0 0
    %700 = vmatmul.mubr.bf16.gmra.mxu0 %v214
    %v701 = vpop.f32.mrf.mxu0
    %v702 = vadd.f32 %v154, %v701
    %v703 = vpop.f32.mrf.mxu0
    %v704 = vadd.f32 %v158, %v703
    %v705 = vpop.f32.mrf.mxu0
    %v706 = vadd.f32 %v154, %v705
    %v707 = vpop.f32.mrf.mxu0
    %v708 = vadd.f32 %v158, %v707
    %709 = vmatprep.mubr.bf16.mxu0 0
    %710 = vmatmul.mubr.bf16.gmra.mxu0 %v215
    %v711 = vpop.f32.mrf.mxu0
    %v712 = vadd.f32 %v154, %v711
    %v713 = vpop.f32.mrf.mxu0
    %v714 = vadd.f32 %v158, %v713
    %v715 = vpop.f32.mrf.mxu0
    %v716 = vadd.f32 %v154, %v715
    %v717 = vpop.f32.mrf.mxu0
    %v718 = vadd.f32 %v158, %v717
    %719 = vmatprep.mubr.bf16.mxu0 0
    %720 = vmatmul.mubr.bf16.gmra.mxu0 %v216
    %v721 = vpop.f32.mrf.mxu0
    %v722 = vadd.f32 %v154, %v721
    %v723 = vpop.f32.mrf.mxu0
    %v724 = vadd.f32 %v158, %v723
    %v725 = vpop.f32.mrf.mxu0
    %v726 = vadd.f32 %v154, %v725
    %v727 = vpop.f32.mrf.mxu0
    %v728 = vadd.f32 %v158, %v727
    %729 = vmatprep.mubr.bf16.mxu0 0
    %730 = vmatmul.mubr.bf16.gmra.mxu0 %v217
    %v731 = vpop.f32.mrf.mxu0
    %v732 = vadd.f32 %v154, %v731
    %v733 = vpop.f32.mrf.mxu0
    %v734 = vadd.f32 %v158, %v733
    %v735 = vpop.f32.mrf.mxu0
    %v736 = vadd.f32 %v154, %v735
    %v737 = vpop.f32.mrf.mxu0
    %v738 = vadd.f32 %v158, %v737
    %739 = vdwg.mxu0
    %740 = vmatprep.subr.bf16.mxu0 %v456
    %741 = vmatpush1.bf16.msra.mxu0 %v455
    %742 = vmatprep.subr.bf16.mxu0 %v449
    %743 = vmatpush1.bf16.msra.mxu0 %v448
    %744 = vmatprep.subr.bf16.mxu0 %v442
    %745 = vmatpush1.bf16.msra.mxu0 %v441
    %746 = vmatprep.subr.bf16.mxu0 %v435
    %747 = vmatpush1.bf16.msra.mxu0 %v434
    %748 = vmatprep.subr.bf16.mxu0 %v428
    %749 = vmatpush1.bf16.msra.mxu0 %v427
    %750 = vmatprep.subr.bf16.mxu0 %v421
    %751 = vmatpush1.bf16.msra.mxu0 %v420
    %752 = vmatprep.subr.bf16.mxu0 %v414
    %753 = vmatpush1.bf16.msra.mxu0 %v413
    %754 = vmatprep.subr.bf16.mxu0 %v407
    %755 = vmatpush1.bf16.msra.mxu0 %v406
    %756 = vmatprep.subr.bf16.mxu0 0
    %757 = vmatpush2.bf16.msra.mxu0 0
    %758 = vmatprep.subr.bf16.mxu0 0
    %759 = vmatpush2.bf16.msra.mxu0 0
    %760 = vmatprep.subr.bf16.mxu0 0
    %761 = vmatpush2.bf16.msra.mxu0 0
    %762 = vmatprep.subr.bf16.mxu0 0
    %763 = vmatpush2.bf16.msra.mxu0 0
    %764 = vmatprep.subr.bf16.mxu0 0
    %765 = vmatpush2.bf16.msra.mxu0 0
    %766 = vmatprep.subr.bf16.mxu0 0
    %767 = vmatpush2.bf16.msra.mxu0 0
    %768 = vmatprep.subr.bf16.mxu0 0
    %769 = vmatpush2.bf16.msra.mxu0 0
    %770 = vmatprep.subr.bf16.mxu0 0
    %771 = vmatpush2.bf16.msra.mxu0 0
    %772 = vmatprep.mubr.bf16.mxu0 0
    %773 = vmatmul.mubr.bf16.gmra.mxu0 %v210
    %v774 = vpop.f32.mrf.mxu0
    %v775 = vadd.f32 %v162, %v774
    %v776 = vpop.f32.mrf.mxu0
    %v777 = vadd.f32 %v166, %v776
    %v778 = vpop.f32.mrf.mxu0
    %v779 = vadd.f32 %v162, %v778
    %v780 = vpop.f32.mrf.mxu0
    %v781 = vadd.f32 %v166, %v780
    %782 = vmatprep.mubr.bf16.mxu0 0
    %783 = vmatmul.mubr.bf16.gmra.mxu0 %v211
    %v784 = vpop.f32.mrf.mxu0
    %v785 = vadd.f32 %v162, %v784
    %v786 = vpop.f32.mrf.mxu0
    %v787 = vadd.f32 %v166, %v786
    %v788 = vpop.f32.mrf.mxu0
    %v789 = vadd.f32 %v162, %v788
    %v790 = vpop.f32.mrf.mxu0
    %v791 = vadd.f32 %v166, %v790
    %792 = vmatprep.mubr.bf16.mxu0 0
    %793 = vmatmul.mubr.bf16.gmra.mxu0 %v212
    %v794 = vpop.f32.mrf.mxu0
    %v795 = vadd.f32 %v162, %v794
    %v796 = vpop.f32.mrf.mxu0
    %v797 = vadd.f32 %v166, %v796
    %v798 = vpop.f32.mrf.mxu0
    %v799 = vadd.f32 %v162, %v798
    %v800 = vpop.f32.mrf.mxu0
    %v801 = vadd.f32 %v166, %v800
    %802 = vmatprep.mubr.bf16.mxu0 0
    %803 = vmatmul.mubr.bf16.gmra.mxu0 %v213
    %v804 = vpop.f32.mrf.mxu0
    %v805 = vadd.f32 %v162, %v804
    %v806 = vpop.f32.mrf.mxu0
    %v807 = vadd.f32 %v166, %v806
    %v808 = vpop.f32.mrf.mxu0
    %v809 = vadd.f32 %v162, %v808
    %v810 = vpop.f32.mrf.mxu0
    %v811 = vadd.f32 %v166, %v810
    %812 = vmatprep.mubr.bf16.mxu0 0
    %813 = vmatmul.mubr.bf16.gmra.mxu0 %v214
    %v814 = vpop.f32.mrf.mxu0
    %v815 = vadd.f32 %v162, %v814
    %v816 = vpop.f32.mrf.mxu0
    %v817 = vadd.f32 %v166, %v816
    %v818 = vpop.f32.mrf.mxu0
    %v819 = vadd.f32 %v162, %v818
    %v820 = vpop.f32.mrf.mxu0
    %v821 = vadd.f32 %v166, %v820
    %822 = vmatprep.mubr.bf16.mxu0 0
    %823 = vmatmul.mubr.bf16.gmra.mxu0 %v215
    %v824 = vpop.f32.mrf.mxu0
    %v825 = vadd.f32 %v162, %v824
    %v826 = vpop.f32.mrf.mxu0
    %v827 = vadd.f32 %v166, %v826
    %v828 = vpop.f32.mrf.mxu0
    %v829 = vadd.f32 %v162, %v828
    %v830 = vpop.f32.mrf.mxu0
    %v831 = vadd.f32 %v166, %v830
    %832 = vmatprep.mubr.bf16.mxu0 0
    %833 = vmatmul.mubr.bf16.gmra.mxu0 %v216
    %v834 = vpop.f32.mrf.mxu0
    %v835 = vadd.f32 %v162, %v834
    %v836 = vpop.f32.mrf.mxu0
    %v837 = vadd.f32 %v166, %v836
    %v838 = vpop.f32.mrf.mxu0
    %v839 = vadd.f32 %v162, %v838
    %v840 = vpop.f32.mrf.mxu0
    %v841 = vadd.f32 %v166, %v840
    %842 = vmatprep.mubr.bf16.mxu0 0
    %843 = vmatmul.mubr.bf16.gmra.mxu0 %v217
    %v844 = vpop.f32.mrf.mxu0
    %v845 = vadd.f32 %v162, %v844
    %v846 = vpop.f32.mrf.mxu0
    %v847 = vadd.f32 %v166, %v846
    %v848 = vpop.f32.mrf.mxu0
    %v849 = vadd.f32 %v162, %v848
    %v850 = vpop.f32.mrf.mxu0
    %v851 = vadd.f32 %v166, %v850
    %852 = vdwg.mxu0
    %853 = vmatprep.subr.bf16.mxu0 0
    %854 = vmatpush1.bf16.msra.mxu0 %v457
    %855 = vmatprep.subr.bf16.mxu0 0
    %856 = vmatpush1.bf16.msra.mxu0 %v450
    %857 = vmatprep.subr.bf16.mxu0 0
    %858 = vmatpush1.bf16.msra.mxu0 %v443
    %859 = vmatprep.subr.bf16.mxu0 0
    %860 = vmatpush1.bf16.msra.mxu0 %v436
    %861 = vmatprep.subr.bf16.mxu0 0
    %862 = vmatpush1.bf16.msra.mxu0 %v429
    %863 = vmatprep.subr.bf16.mxu0 0
    %864 = vmatpush1.bf16.msra.mxu0 %v422
    %865 = vmatprep.subr.bf16.mxu0 0
    %866 = vmatpush1.bf16.msra.mxu0 %v415
    %867 = vmatprep.subr.bf16.mxu0 0
    %868 = vmatpush1.bf16.msra.mxu0 %v408
    %869 = vmatprep.subr.bf16.mxu0 0
    %870 = vmatpush2.bf16.msra.mxu0 0
    %871 = vmatprep.subr.bf16.mxu0 0
    %872 = vmatpush2.bf16.msra.mxu0 0
    %873 = vmatprep.subr.bf16.mxu0 0
    %874 = vmatpush2.bf16.msra.mxu0 0
    %875 = vmatprep.subr.bf16.mxu0 0
    %876 = vmatpush2.bf16.msra.mxu0 0
    %877 = vmatprep.subr.bf16.mxu0 0
    %878 = vmatpush2.bf16.msra.mxu0 0
    %879 = vmatprep.subr.bf16.mxu0 0
    %880 = vmatpush2.bf16.msra.mxu0 0
    %881 = vmatprep.subr.bf16.mxu0 0
    %882 = vmatpush2.bf16.msra.mxu0 0
    %883 = vmatprep.subr.bf16.mxu0 0
    %884 = vmatpush2.bf16.msra.mxu0 0
    %885 = vmatprep.mubr.bf16.mxu0 0
    %886 = vmatmul.mubr.bf16.gmra.mxu0 %v210
    %v887 = vpop.f32.mrf.mxu0
    %v888 = vadd.f32 %v170, %v887
    %v889 = vpop.f32.mrf.mxu0
    %v890 = vpop.f32.mrf.mxu0
    %v891 = vadd.f32 %v170, %v890
    %v892 = vpop.f32.mrf.mxu0
    %893 = vmatprep.mubr.bf16.mxu0 0
    %894 = vmatmul.mubr.bf16.gmra.mxu0 %v211
    %v895 = vpop.f32.mrf.mxu0
    %v896 = vadd.f32 %v170, %v895
    %v897 = vpop.f32.mrf.mxu0
    %v898 = vpop.f32.mrf.mxu0
    %v899 = vadd.f32 %v170, %v898
    %v900 = vpop.f32.mrf.mxu0
    %901 = vmatprep.mubr.bf16.mxu0 0
    %902 = vmatmul.mubr.bf16.gmra.mxu0 %v212
    %v903 = vpop.f32.mrf.mxu0
    %v904 = vadd.f32 %v170, %v903
    %v905 = vpop.f32.mrf.mxu0
    %v906 = vpop.f32.mrf.mxu0
    %v907 = vadd.f32 %v170, %v906
    %v908 = vpop.f32.mrf.mxu0
    %909 = vmatprep.mubr.bf16.mxu0 0
    %910 = vmatmul.mubr.bf16.gmra.mxu0 %v213
    %v911 = vpop.f32.mrf.mxu0
    %v912 = vadd.f32 %v170, %v911
    %v913 = vpop.f32.mrf.mxu0
    %v914 = vpop.f32.mrf.mxu0
    %v915 = vadd.f32 %v170, %v914
    %v916 = vpop.f32.mrf.mxu0
    %917 = vmatprep.mubr.bf16.mxu0 0
    %918 = vmatmul.mubr.bf16.gmra.mxu0 %v214
    %v919 = vpop.f32.mrf.mxu0
    %v920 = vadd.f32 %v170, %v919
    %v921 = vpop.f32.mrf.mxu0
    %v922 = vpop.f32.mrf.mxu0
    %v923 = vadd.f32 %v170, %v922
    %v924 = vpop.f32.mrf.mxu0
    %925 = vmatprep.mubr.bf16.mxu0 0
    %926 = vmatmul.mubr.bf16.gmra.mxu0 %v215
    %v927 = vpop.f32.mrf.mxu0
    %v928 = vadd.f32 %v170, %v927
    %v929 = vpop.f32.mrf.mxu0
    %v930 = vpop.f32.mrf.mxu0
    %v931 = vadd.f32 %v170, %v930
    %v932 = vpop.f32.mrf.mxu0
    %933 = vmatprep.mubr.bf16.mxu0 0
    %934 = vmatmul.mubr.bf16.gmra.mxu0 %v216
    %v935 = vpop.f32.mrf.mxu0
    %v936 = vadd.f32 %v170, %v935
    %v937 = vpop.f32.mrf.mxu0
    %v938 = vpop.f32.mrf.mxu0
    %v939 = vadd.f32 %v170, %v938
    %v940 = vpop.f32.mrf.mxu0
    %941 = vmatprep.mubr.bf16.mxu0 0
    %942 = vmatmul.mubr.bf16.gmra.mxu0 %v217
    %v943 = vpop.f32.mrf.mxu0
    %v944 = vadd.f32 %v170, %v943
    %v945 = vpop.f32.mrf.mxu0
    %v946 = vpop.f32.mrf.mxu0
    %v947 = vadd.f32 %v170, %v946
    %v948 = vpop.f32.mrf.mxu0
    %949 = vdwg.mxu0
    %v950 = vmax.f32 %v549, 0.0
    %v951 = vmax.f32 %v551, 0.0
    %v952 = vmax.f32 %v662, 0.0
    %v953 = vmax.f32 %v664, 0.0
    %v954 = vmax.f32 %v775, 0.0
    %v955 = vmax.f32 %v777, 0.0
    %v956 = vmax.f32 %v888, 0.0
    %v957 = vmax.f32 %v553, 0.0
    %v958 = vmax.f32 %v555, 0.0
    %v959 = vmax.f32 %v666, 0.0
    %v960 = vmax.f32 %v668, 0.0
    %v961 = vmax.f32 %v779, 0.0
    %v962 = vmax.f32 %v781, 0.0
    %v963 = vmax.f32 %v891, 0.0
    %v964 = vmax.f32 %v559, 0.0
    %v965 = vmax.f32 %v561, 0.0
    %v966 = vmax.f32 %v672, 0.0
    %v967 = vmax.f32 %v674, 0.0
    %v968 = vmax.f32 %v785, 0.0
    %v969 = vmax.f32 %v787, 0.0
    %v970 = vmax.f32 %v896, 0.0
    %v971 = vmax.f32 %v563, 0.0
    %v972 = vmax.f32 %v565, 0.0
    %v973 = vmax.f32 %v676, 0.0
    %v974 = vmax.f32 %v678, 0.0
    %v975 = vmax.f32 %v789, 0.0
    %v976 = vmax.f32 %v791, 0.0
    %v977 = vmax.f32 %v899, 0.0
    %v978 = vmax.f32 %v569, 0.0
    %v979 = vmax.f32 %v571, 0.0
    %v980 = vmax.f32 %v682, 0.0
    %v981 = vmax.f32 %v684, 0.0
    %v982 = vmax.f32 %v795, 0.0
    %v983 = vmax.f32 %v797, 0.0
    %v984 = vmax.f32 %v904, 0.0
    %v985 = vmax.f32 %v573, 0.0
    %v986 = vmax.f32 %v575, 0.0
    %v987 = vmax.f32 %v686, 0.0
    %v988 = vmax.f32 %v688, 0.0
    %v989 = vmax.f32 %v799, 0.0
    %v990 = vmax.f32 %v801, 0.0
    %v991 = vmax.f32 %v907, 0.0
    %v992 = vmax.f32 %v579, 0.0
    %v993 = vmax.f32 %v581, 0.0
    %v994 = vmax.f32 %v692, 0.0
    %v995 = vmax.f32 %v694, 0.0
    %v996 = vmax.f32 %v805, 0.0
    %v997 = vmax.f32 %v807, 0.0
    %v998 = vmax.f32 %v912, 0.0
    %v999 = vmax.f32 %v583, 0.0
    %v1000 = vmax.f32 %v585, 0.0
    %v1001 = vmax.f32 %v696, 0.0
    %v1002 = vmax.f32 %v698, 0.0
    %v1003 = vmax.f32 %v809, 0.0
    %v1004 = vmax.f32 %v811, 0.0
    %v1005 = vmax.f32 %v915, 0.0
    %v1006 = vmax.f32 %v589, 0.0
    %v1007 = vmax.f32 %v591, 0.0
    %v1008 = vmax.f32 %v702, 0.0
    %v1009 = vmax.f32 %v704, 0.0
    %v1010 = vmax.f32 %v815, 0.0
    %v1011 = vmax.f32 %v817, 0.0
    %v1012 = vmax.f32 %v920, 0.0
    %v1013 = vmax.f32 %v593, 0.0
    %v1014 = vmax.f32 %v595, 0.0
    %v1015 = vmax.f32 %v706, 0.0
    %v1016 = vmax.f32 %v708, 0.0
    %v1017 = vmax.f32 %v819, 0.0
    %v1018 = vmax.f32 %v821, 0.0
    %v1019 = vmax.f32 %v923, 0.0
    %v1020 = vmax.f32 %v599, 0.0
    %v1021 = vmax.f32 %v601, 0.0
    %v1022 = vmax.f32 %v712, 0.0
    %v1023 = vmax.f32 %v714, 0.0
    %v1024 = vmax.f32 %v825, 0.0
    %v1025 = vmax.f32 %v827, 0.0
    %v1026 = vmax.f32 %v928, 0.0
    %v1027 = vmax.f32 %v603, 0.0
    %v1028 = vmax.f32 %v605, 0.0
    %v1029 = vmax.f32 %v716, 0.0
    %v1030 = vmax.f32 %v718, 0.0
    %v1031 = vmax.f32 %v829, 0.0
    %v1032 = vmax.f32 %v831, 0.0
    %v1033 = vmax.f32 %v931, 0.0
    %v1034 = vmax.f32 %v609, 0.0
    %v1035 = vmax.f32 %v611, 0.0
    %v1036 = vmax.f32 %v722, 0.0
    %v1037 = vmax.f32 %v724, 0.0
    %v1038 = vmax.f32 %v835, 0.0
    %v1039 = vmax.f32 %v837, 0.0
    %v1040 = vmax.f32 %v936, 0.0
    %v1041 = vmax.f32 %v613, 0.0
    %v1042 = vmax.f32 %v615, 0.0
    %v1043 = vmax.f32 %v726, 0.0
    %v1044 = vmax.f32 %v728, 0.0
    %v1045 = vmax.f32 %v839, 0.0
    %v1046 = vmax.f32 %v841, 0.0
    %v1047 = vmax.f32 %v939, 0.0
    %v1048 = vmax.f32 %v619, 0.0
    %v1049 = vmax.f32 %v621, 0.0
    %v1050 = vmax.f32 %v732, 0.0
    %v1051 = vmax.f32 %v734, 0.0
    %v1052 = vmax.f32 %v845, 0.0
    %v1053 = vmax.f32 %v847, 0.0
    %v1054 = vmax.f32 %v944, 0.0
    %v1055 = vmax.f32 %v623, 0.0
    %v1056 = vmax.f32 %v625, 0.0
    %v1057 = vmax.f32 %v736, 0.0
    %v1058 = vmax.f32 %v738, 0.0
    %v1059 = vmax.f32 %v849, 0.0
    %v1060 = vmax.f32 %v851, 0.0
    %v1061 = vmax.f32 %v947, 0.0
    %v1062 = vmax.f32 %v950, %v953
    %v1063 = vmax.f32 %v951, %v954
    %v1064 = vmax.f32 %v952, %v955
    %v1065 = vmax.f32 %v957, %v960
    %v1066 = vmax.f32 %v958, %v961
    %v1067 = vmax.f32 %v959, %v962
    %v1068 = vmax.f32 %v964, %v967
    %v1069 = vmax.f32 %v965, %v968
    %v1070 = vmax.f32 %v966, %v969
    %v1071 = vmax.f32 %v971, %v974
    %v1072 = vmax.f32 %v972, %v975
    %v1073 = vmax.f32 %v973, %v976
    %v1074 = vmax.f32 %v978, %v981
    %v1075 = vmax.f32 %v979, %v982
    %v1076 = vmax.f32 %v980, %v983
    %v1077 = vmax.f32 %v985, %v988
    %v1078 = vmax.f32 %v986, %v989
    %v1079 = vmax.f32 %v987, %v990
    %v1080 = vmax.f32 %v992, %v995
    %v1081 = vmax.f32 %v993, %v996
    %v1082 = vmax.f32 %v994, %v997
    %v1083 = vmax.f32 %v999, %v1002
    %v1084 = vmax.f32 %v1000, %v1003
    %v1085 = vmax.f32 %v1001, %v1004
    %v1086 = vmax.f32 %v1006, %v1009
    %v1087 = vmax.f32 %v1007, %v1010
    %v1088 = vmax.f32 %v1008, %v1011
    %v1089 = vmax.f32 %v1013, %v1016
    %v1090 = vmax.f32 %v1014, %v1017
    %v1091 = vmax.f32 %v1015, %v1018
    %v1092 = vmax.f32 %v1020, %v1023
    %v1093 = vmax.f32 %v1021, %v1024
    %v1094 = vmax.f32 %v1022, %v1025
    %v1095 = vmax.f32 %v1027, %v1030
    %v1096 = vmax.f32 %v1028, %v1031
    %v1097 = vmax.f32 %v1029, %v1032
    %v1098 = vmax.f32 %v1034, %v1037
    %v1099 = vmax.f32 %v1035, %v1038
    %v1100 = vmax.f32 %v1036, %v1039
    %v1101 = vmax.f32 %v1041, %v1044
    %v1102 = vmax.f32 %v1042, %v1045
    %v1103 = vmax.f32 %v1043, %v1046
    %v1104 = vmax.f32 %v1048, %v1051
    %v1105 = vmax.f32 %v1049, %v1052
    %v1106 = vmax.f32 %v1050, %v1053
    %v1107 = vmax.f32 %v1055, %v1058
    %v1108 = vmax.f32 %v1056, %v1059
    %v1109 = vmax.f32 %v1057, %v1060
    %v1110 = vpack.c.bf16 %v1065, %v1062
    %v1111 = vpack.c.bf16 %v1066, %v1063
    %v1112 = vpack.c.bf16 %v1067, %v1064
    %v1113 = vpack.c.bf16 %v1071, %v1068
    %v1114 = vpack.c.bf16 %v1072, %v1069
    %v1115 = vpack.c.bf16 %v1073, %v1070
    %v1116 = vpack.c.bf16 %v1077, %v1074
    %v1117 = vpack.c.bf16 %v1078, %v1075
    %v1118 = vpack.c.bf16 %v1079, %v1076
    %v1119 = vpack.c.bf16 %v1083, %v1080
    %v1120 = vpack.c.bf16 %v1084, %v1081
    %v1121 = vpack.c.bf16 %v1085, %v1082
    %v1122 = vpack.c.bf16 %v1089, %v1086
    %v1123 = vpack.c.bf16 %v1090, %v1087
    %v1124 = vpack.c.bf16 %v1091, %v1088
    %v1125 = vpack.c.bf16 %v1095, %v1092
    %v1126 = vpack.c.bf16 %v1096, %v1093
    %v1127 = vpack.c.bf16 %v1097, %v1094
    %v1128 = vpack.c.bf16 %v1101, %v1098
    %v1129 = vpack.c.bf16 %v1102, %v1099
    %v1130 = vpack.c.bf16 %v1103, %v1100
    %v1131 = vpack.c.bf16 %v1107, %v1104
    %v1132 = vpack.c.bf16 %v1108, %v1105
    %v1133 = vpack.c.bf16 %v1109, %v1106
    %v1158 = vunpack.c.l.b16 %v1110
    %v1159 = vunpack.c.l.b16 %v1111
    %v1160 = vunpack.c.l.b16 %v1112
    %v1161 = vunpack.c.h.b16 %v1110
    %v1162 = vunpack.c.h.b16 %v1111
    %v1163 = vunpack.c.h.b16 %v1112
    %v1164 = vunpack.c.l.b16 %v1113
    %v1165 = vunpack.c.l.b16 %v1114
    %v1166 = vunpack.c.l.b16 %v1115
    %v1167 = vunpack.c.h.b16 %v1113
    %v1168 = vunpack.c.h.b16 %v1114
    %v1169 = vunpack.c.h.b16 %v1115
    %v1170 = vunpack.c.l.b16 %v1116
    %v1171 = vunpack.c.l.b16 %v1117
    %v1172 = vunpack.c.l.b16 %v1118
    %v1173 = vunpack.c.h.b16 %v1116
    %v1174 = vunpack.c.h.b16 %v1117
    %v1175 = vunpack.c.h.b16 %v1118
    %v1176 = vunpack.c.l.b16 %v1119
    %v1177 = vunpack.c.l.b16 %v1120
    %v1178 = vunpack.c.l.b16 %v1121
    %v1179 = vunpack.c.h.b16 %v1119
    %v1180 = vunpack.c.h.b16 %v1120
    %v1181 = vunpack.c.h.b16 %v1121
    %v1182 = vunpack.c.l.b16 %v1122
    %v1183 = vunpack.c.l.b16 %v1123
    %v1184 = vunpack.c.l.b16 %v1124
    %v1185 = vunpack.c.h.b16 %v1122
    %v1186 = vunpack.c.h.b16 %v1123
    %v1187 = vunpack.c.h.b16 %v1124
    %v1188 = vunpack.c.l.b16 %v1125
    %v1189 = vunpack.c.l.b16 %v1126
    %v1190 = vunpack.c.l.b16 %v1127
    %v1191 = vunpack.c.h.b16 %v1125
    %v1192 = vunpack.c.h.b16 %v1126
    %v1193 = vunpack.c.h.b16 %v1127
    %v1194 = vunpack.c.l.b16 %v1128
    %v1195 = vunpack.c.l.b16 %v1129
    %v1196 = vunpack.c.l.b16 %v1130
    %v1197 = vunpack.c.h.b16 %v1128
    %v1198 = vunpack.c.h.b16 %v1129
    %v1199 = vunpack.c.h.b16 %v1130
    %v1200 = vunpack.c.l.b16 %v1131
    %v1201 = vunpack.c.l.b16 %v1132
    %v1202 = vunpack.c.l.b16 %v1133
    %v1203 = vunpack.c.h.b16 %v1131
    %v1204 = vunpack.c.h.b16 %v1132
    %v1205 = vunpack.c.h.b16 %v1133
    %v1206 = vpack.c.b16 %v1159, %v1158
    %v1207 = vpack.c.b16 %v1160, %v1160
    %v1208 = vpack.c.b16 %v1162, %v1161
    %v1209 = vpack.c.b16 %v1163, %v1163
    %v1210 = vpack.c.b16 %v1165, %v1164
    %v1211 = vpack.c.b16 %v1166, %v1166
    %v1212 = vpack.c.b16 %v1168, %v1167
    %v1213 = vpack.c.b16 %v1169, %v1169
    %v1214 = vpack.c.b16 %v1171, %v1170
    %v1215 = vpack.c.b16 %v1172, %v1172
    %v1216 = vpack.c.b16 %v1174, %v1173
    %v1217 = vpack.c.b16 %v1175, %v1175
    %v1218 = vpack.c.b16 %v1177, %v1176
    %v1219 = vpack.c.b16 %v1178, %v1178
    %v1220 = vpack.c.b16 %v1180, %v1179
    %v1221 = vpack.c.b16 %v1181, %v1181
    %v1222 = vpack.c.b16 %v1183, %v1182
    %v1223 = vpack.c.b16 %v1184, %v1184
    %v1224 = vpack.c.b16 %v1186, %v1185
    %v1225 = vpack.c.b16 %v1187, %v1187
    %v1226 = vpack.c.b16 %v1189, %v1188
    %v1227 = vpack.c.b16 %v1190, %v1190
    %v1228 = vpack.c.b16 %v1192, %v1191
    %v1229 = vpack.c.b16 %v1193, %v1193
    %v1230 = vpack.c.b16 %v1195, %v1194
    %v1231 = vpack.c.b16 %v1196, %v1196
    %v1232 = vpack.c.b16 %v1198, %v1197
    %v1233 = vpack.c.b16 %v1199, %v1199
    %v1234 = vpack.c.b16 %v1201, %v1200
    %v1235 = vpack.c.b16 %v1202, %v1202
    %v1236 = vpack.c.b16 %v1204, %v1203
    %v1237 = vpack.c.b16 %v1205, %v1205
    %1270 = vst [vmem:[#allocation2] sm:$0xff] %v1206
    %1271 = vst [vmem:[#allocation2 + $0x8] sm:$0xf] %v1207
    %1272 = vst [vmem:[#allocation2 + $0x10] sm:$0xff] %v1208
    %1273 = vst [vmem:[#allocation2 + $0x18] sm:$0xf] %v1209
    %1274 = vst [vmem:[#allocation2 + $0x20] sm:$0xff] %v1210
    %1275 = vst [vmem:[#allocation2 + $0x28] sm:$0xf] %v1211
    %1276 = vst [vmem:[#allocation2 + $0x30] sm:$0xff] %v1212
    %1277 = vst [vmem:[#allocation2 + $0x38] sm:$0xf] %v1213
    %1278 = vst [vmem:[#allocation2 + $0x40] sm:$0xff] %v1214
    %1279 = vst [vmem:[#allocation2 + $0x48] sm:$0xf] %v1215
    %1280 = vst [vmem:[#allocation2 + $0x50] sm:$0xff] %v1216
    %1281 = vst [vmem:[#allocation2 + $0x58] sm:$0xf] %v1217
    %1282 = vst [vmem:[#allocation2 + $0x60] sm:$0xff] %v1218
    %1283 = vst [vmem:[#allocation2 + $0x68] sm:$0xf] %v1219
    %1284 = vst [vmem:[#allocation2 + $0x70] sm:$0xff] %v1220
    %1285 = vst [vmem:[#allocation2 + $0x78] sm:$0xf] %v1221
    %1286 = vst [vmem:[#allocation2 + $0x80] sm:$0xff] %v1222
    %1287 = vst [vmem:[#allocation2 + $0x88] sm:$0xf] %v1223
    %1288 = vst [vmem:[#allocation2 + $0x90] sm:$0xff] %v1224
    %1289 = vst [vmem:[#allocation2 + $0x98] sm:$0xf] %v1225
    %1290 = vst [vmem:[#allocation2 + $0xa0] sm:$0xff] %v1226
    %1291 = vst [vmem:[#allocation2 + $0xa8] sm:$0xf] %v1227
    %1292 = vst [vmem:[#allocation2 + $0xb0] sm:$0xff] %v1228
    %1293 = vst [vmem:[#allocation2 + $0xb8] sm:$0xf] %v1229
    %1294 = vst [vmem:[#allocation2 + $0xc0] sm:$0xff] %v1230
    %1295 = vst [vmem:[#allocation2 + $0xc8] sm:$0xf] %v1231
    %1296 = vst [vmem:[#allocation2 + $0xd0] sm:$0xff] %v1232
    %1297 = vst [vmem:[#allocation2 + $0xd8] sm:$0xf] %v1233
    %1298 = vst [vmem:[#allocation2 + $0xe0] sm:$0xff] %v1234
    %1299 = vst [vmem:[#allocation2 + $0xe8] sm:$0xf] %v1235
    %1300 = vst [vmem:[#allocation2 + $0xf0] sm:$0xff] %v1236
    %1301 = vst [vmem:[#allocation2 + $0xf8] sm:$0xf] %v1237
    %v1302 = vpack.c.bf16 %v963, %v956
    %v1303 = vpack.c.bf16 %v977, %v970
    %v1304 = vpack.c.bf16 %v991, %v984
    %v1305 = vpack.c.bf16 %v1005, %v998
    %v1306 = vpack.c.bf16 %v1019, %v1012
    %v1307 = vpack.c.bf16 %v1033, %v1026
    %v1308 = vpack.c.bf16 %v1047, %v1040
    %v1309 = vpack.c.bf16 %v1061, %v1054
    %v1318 = vunpack.c.l.b16 %v1302
    %v1319 = vunpack.c.h.b16 %v1302
    %v1320 = vunpack.c.l.b16 %v1303
    %v1321 = vunpack.c.h.b16 %v1303
    %v1322 = vunpack.c.l.b16 %v1304
    %v1323 = vunpack.c.h.b16 %v1304
    %v1324 = vunpack.c.l.b16 %v1305
    %v1325 = vunpack.c.h.b16 %v1305
    %v1326 = vunpack.c.l.b16 %v1306
    %v1327 = vunpack.c.h.b16 %v1306
    %v1328 = vunpack.c.l.b16 %v1307
    %v1329 = vunpack.c.h.b16 %v1307
    %v1330 = vunpack.c.l.b16 %v1308
    %v1331 = vunpack.c.h.b16 %v1308
    %v1332 = vunpack.c.l.b16 %v1309
    %v1333 = vunpack.c.h.b16 %v1309
    %v1334 = vpack.c.b16 %v1318, %v1318
    %v1335 = vpack.c.b16 %v1319, %v1319
    %v1336 = vpack.c.b16 %v1320, %v1320
    %v1337 = vpack.c.b16 %v1321, %v1321
    %v1338 = vpack.c.b16 %v1322, %v1322
    %v1339 = vpack.c.b16 %v1323, %v1323
    %v1340 = vpack.c.b16 %v1324, %v1324
    %v1341 = vpack.c.b16 %v1325, %v1325
    %v1342 = vpack.c.b16 %v1326, %v1326
    %v1343 = vpack.c.b16 %v1327, %v1327
    %v1344 = vpack.c.b16 %v1328, %v1328
    %v1345 = vpack.c.b16 %v1329, %v1329
    %v1346 = vpack.c.b16 %v1330, %v1330
    %v1347 = vpack.c.b16 %v1331, %v1331
    %v1348 = vpack.c.b16 %v1332, %v1332
    %v1349 = vpack.c.b16 %v1333, %v1333
    %1366 = vst [vmem:[#allocation2 + $0xc] sm:$0xf] %v1334
    %1367 = vst [vmem:[#allocation2 + $0x1c] sm:$0xf] %v1335
    %1368 = vst [vmem:[#allocation2 + $0x2c] sm:$0xf] %v1336
    %1369 = vst [vmem:[#allocation2 + $0x3c] sm:$0xf] %v1337
    %1370 = vst [vmem:[#allocation2 + $0x4c] sm:$0xf] %v1338
    %1371 = vst [vmem:[#allocation2 + $0x5c] sm:$0xf] %v1339
    %1372 = vst [vmem:[#allocation2 + $0x6c] sm:$0xf] %v1340
    %1373 = vst [vmem:[#allocation2 + $0x7c] sm:$0xf] %v1341
    %1374 = vst [vmem:[#allocation2 + $0x8c] sm:$0xf] %v1342
    %1375 = vst [vmem:[#allocation2 + $0x9c] sm:$0xf] %v1343
    %1376 = vst [vmem:[#allocation2 + $0xac] sm:$0xf] %v1344
    %1377 = vst [vmem:[#allocation2 + $0xbc] sm:$0xf] %v1345
    %1378 = vst [vmem:[#allocation2 + $0xcc] sm:$0xf] %v1346
    %1379 = vst [vmem:[#allocation2 + $0xdc] sm:$0xf] %v1347
    %1380 = vst [vmem:[#allocation2 + $0xec] sm:$0xf] %v1348
    %1381 = vst [vmem:[#allocation2 + $0xfc] sm:$0xf] %v1349
    %v1382 = vld [vmem:[#allocation2] sm:$0xff]
    %v1383 = vld [vmem:[#allocation2 + $0x8] sm:$0xff]
    %v1384 = vld [vmem:[#allocation2 + $0x10] sm:$0xff]
    %v1385 = vld [vmem:[#allocation2 + $0x18] sm:$0xff]
    %v1386 = vld [vmem:[#allocation2 + $0x20] sm:$0xff]
    %v1387 = vld [vmem:[#allocation2 + $0x28] sm:$0xff]
    %v1388 = vld [vmem:[#allocation2 + $0x30] sm:$0xff]
    %v1389 = vld [vmem:[#allocation2 + $0x38] sm:$0xff]
    %v1390 = vld [vmem:[#allocation2 + $0x40] sm:$0xff]
    %v1391 = vld [vmem:[#allocation2 + $0x48] sm:$0xff]
    %v1392 = vld [vmem:[#allocation2 + $0x50] sm:$0xff]
    %v1393 = vld [vmem:[#allocation2 + $0x58] sm:$0xff]
    %v1394 = vld [vmem:[#allocation2 + $0x60] sm:$0xff]
    %v1395 = vld [vmem:[#allocation2 + $0x68] sm:$0xff]
    %v1396 = vld [vmem:[#allocation2 + $0x70] sm:$0xff]
    %v1397 = vld [vmem:[#allocation2 + $0x78] sm:$0xff]
    %v1398 = vld [vmem:[#allocation2 + $0x80] sm:$0xff]
    %v1399 = vld [vmem:[#allocation2 + $0x88] sm:$0xff]
    %v1400 = vld [vmem:[#allocation2 + $0x90] sm:$0xff]
    %v1401 = vld [vmem:[#allocation2 + $0x98] sm:$0xff]
    %v1402 = vld [vmem:[#allocation2 + $0xa0] sm:$0xff]
    %v1403 = vld [vmem:[#allocation2 + $0xa8] sm:$0xff]
    %v1404 = vld [vmem:[#allocation2 + $0xb0] sm:$0xff]
    %v1405 = vld [vmem:[#allocation2 + $0xb8] sm:$0xff]
    %v1406 = vld [vmem:[#allocation2 + $0xc0] sm:$0xff]
    %v1407 = vld [vmem:[#allocation2 + $0xc8] sm:$0xff]
    %v1408 = vld [vmem:[#allocation2 + $0xd0] sm:$0xff]
    %v1409 = vld [vmem:[#allocation2 + $0xd8] sm:$0xff]
    %v1410 = vld [vmem:[#allocation2 + $0xe0] sm:$0xff]
    %v1411 = vld [vmem:[#allocation2 + $0xe8] sm:$0xff]
    %v1412 = vld [vmem:[#allocation2 + $0xf0] sm:$0xff]
    %v1413 = vld [vmem:[#allocation2 + $0xf8] sm:$0xff]
    %v1414 = vld [vmem:[#allocation5] sm:$0xf]
    %v1415 = vld [vmem:[#allocation5 + $0x4] sm:$0xf]
    %v1416 = vld [vmem:[#allocation5 + $0x8] sm:$0xf]
    %v1417 = vld [vmem:[#allocation5 + $0xc] sm:$0xf]
    %v1418 = vld [vmem:[#allocation5 + $0x10] sm:$0xf]
    %v1419 = vld [vmem:[#allocation5 + $0x14] sm:$0xf]
    %v1420 = vld [vmem:[#allocation5 + $0x18] sm:$0xf]
    %v1421 = vld [vmem:[#allocation5 + $0x1c] sm:$0xf]
    %v1422 = vld [vmem:[#allocation5 + $0x20] sm:$0xf]
    %v1423 = vld [vmem:[#allocation5 + $0x24] sm:$0xf]
    %v1424 = vld [vmem:[#allocation5 + $0x28] sm:$0xf]
    %v1425 = vld [vmem:[#allocation5 + $0x2c] sm:$0xf]
    %v1426 = vld [vmem:[#allocation5 + $0x30] sm:$0xf]
    %v1427 = vld [vmem:[#allocation5 + $0x34] sm:$0xf]
    %v1428 = vld [vmem:[#allocation5 + $0x38] sm:$0xf]
    %v1429 = vld [vmem:[#allocation5 + $0x3c] sm:$0xf]
    %v1430 = vld [vmem:[#allocation5 + $0x40] sm:$0xf]
    %v1431 = vld [vmem:[#allocation5 + $0x44] sm:$0xf]
    %v1432 = vld [vmem:[#allocation5 + $0x48] sm:$0xf]
    %v1433 = vld [vmem:[#allocation5 + $0x4c] sm:$0xf]
    %v1434 = vld [vmem:[#allocation5 + $0x50] sm:$0xf]
    %v1435 = vld [vmem:[#allocation5 + $0x54] sm:$0xf]
    %v1436 = vld [vmem:[#allocation5 + $0x58] sm:$0xf]
    %v1437 = vld [vmem:[#allocation5 + $0x5c] sm:$0xf]
    %v1438 = vld [vmem:[#allocation5 + $0x60] sm:$0xf]
    %v1439 = vld [vmem:[#allocation5 + $0x64] sm:$0xf]
    %v1440 = vld [vmem:[#allocation5 + $0x68] sm:$0xf]
    %v1441 = vld [vmem:[#allocation5 + $0x6c] sm:$0xf]
    %v1442 = vld [vmem:[#allocation5 + $0x70] sm:$0xf]
    %v1443 = vld [vmem:[#allocation5 + $0x74] sm:$0xf]
    %v1444 = vld [vmem:[#allocation5 + $0x78] sm:$0xf]
    %v1445 = vld [vmem:[#allocation5 + $0x7c] sm:$0xf]
    %v1446 = vld [vmem:[#allocation5 + $0x80] sm:$0xf]
    %v1447 = vld [vmem:[#allocation5 + $0x84] sm:$0xf]
    %v1448 = vld [vmem:[#allocation5 + $0x88] sm:$0xf]
    %v1449 = vld [vmem:[#allocation5 + $0x8c] sm:$0xf]
    %v1450 = vld [vmem:[#allocation5 + $0x90] sm:$0xf]
    %v1451 = vld [vmem:[#allocation5 + $0x94] sm:$0xf]
    %v1452 = vld [vmem:[#allocation5 + $0x98] sm:$0xf]
    %v1453 = vld [vmem:[#allocation5 + $0x9c] sm:$0xf]
    %v1454 = vld [vmem:[#allocation5 + $0xa0] sm:$0xf]
    %v1455 = vld [vmem:[#allocation5 + $0xa4] sm:$0xf]
    %v1456 = vld [vmem:[#allocation5 + $0xa8] sm:$0xf]
    %v1457 = vld [vmem:[#allocation5 + $0xac] sm:$0xf]
    %v1458 = vld [vmem:[#allocation5 + $0xb0] sm:$0xf]
    %v1459 = vld [vmem:[#allocation5 + $0xb4] sm:$0xf]
    %v1460 = vld [vmem:[#allocation5 + $0xb8] sm:$0xf]
    %v1461 = vld [vmem:[#allocation5 + $0xbc] sm:$0xf]
    %v1462 = vld [vmem:[#allocation5 + $0xc0] sm:$0xf]
    %v1463 = vld [vmem:[#allocation5 + $0xc4] sm:$0xf]
    %v1464 = vld [vmem:[#allocation5 + $0xc8] sm:$0xf]
    %v1465 = vld [vmem:[#allocation5 + $0xcc] sm:$0xf]
    %v1466 = vld [vmem:[#allocation5 + $0xd0] sm:$0xf]
    %v1467 = vld [vmem:[#allocation5 + $0xd4] sm:$0xf]
    %v1468 = vld [vmem:[#allocation5 + $0xd8] sm:$0xf]
    %v1469 = vld [vmem:[#allocation5 + $0xdc] sm:$0xf]
    %v1470 = vld [vmem:[#allocation5 + $0xe0] sm:$0xf]
    %v1471 = vld [vmem:[#allocation5 + $0xe4] sm:$0xf]
    %v1472 = vld [vmem:[#allocation5 + $0xe8] sm:$0xf]
    %v1473 = vld [vmem:[#allocation5 + $0xec] sm:$0xf]
    %v1474 = vld [vmem:[#allocation5 + $0xf0] sm:$0xf]
    %v1475 = vld [vmem:[#allocation5 + $0xf4] sm:$0xf]
    %v1476 = vld [vmem:[#allocation5 + $0xf8] sm:$0xf]
    %v1477 = vld [vmem:[#allocation5 + $0xfc] sm:$0xf]
    %v1478 = vld [vmem:[%s4] sm:$0x1]
    %v1480 = vlaneseq
    %v1481 = vshrl.u32 %v1480, 7
    %v1482 = vsub.s32 0, %v1481
    %v1483 = vrot.slane %v1478, %v1482
    %v1517 = vunpack.c.l.b16 %v1382
    %v1518 = vunpack.c.h.b16 %v1382
    %v1519 = vunpack.c.l.b16 %v1383
    %v1520 = vunpack.c.h.b16 %v1383
    %v1521 = vunpack.c.l.b16 %v1384
    %v1522 = vunpack.c.h.b16 %v1384
    %v1523 = vunpack.c.l.b16 %v1385
    %v1524 = vunpack.c.h.b16 %v1385
    %v1525 = vunpack.c.l.b16 %v1386
    %v1526 = vunpack.c.h.b16 %v1386
    %v1527 = vunpack.c.l.b16 %v1387
    %v1528 = vunpack.c.h.b16 %v1387
    %v1529 = vunpack.c.l.b16 %v1388
    %v1530 = vunpack.c.h.b16 %v1388
    %v1531 = vunpack.c.l.b16 %v1389
    %v1532 = vunpack.c.h.b16 %v1389
    %v1533 = vunpack.c.l.b16 %v1390
    %v1534 = vunpack.c.h.b16 %v1390
    %v1535 = vunpack.c.l.b16 %v1391
    %v1536 = vunpack.c.h.b16 %v1391
    %v1537 = vunpack.c.l.b16 %v1392
    %v1538 = vunpack.c.h.b16 %v1392
    %v1539 = vunpack.c.l.b16 %v1393
    %v1540 = vunpack.c.h.b16 %v1393
    %v1541 = vunpack.c.l.b16 %v1394
    %v1542 = vunpack.c.h.b16 %v1394
    %v1543 = vunpack.c.l.b16 %v1395
    %v1544 = vunpack.c.h.b16 %v1395
    %v1545 = vunpack.c.l.b16 %v1396
    %v1546 = vunpack.c.h.b16 %v1396
    %v1547 = vunpack.c.l.b16 %v1397
    %v1548 = vunpack.c.h.b16 %v1397
    %v1549 = vunpack.c.l.b16 %v1398
    %v1550 = vunpack.c.h.b16 %v1398
    %v1551 = vunpack.c.l.b16 %v1399
    %v1552 = vunpack.c.h.b16 %v1399
    %v1553 = vunpack.c.l.b16 %v1400
    %v1554 = vunpack.c.h.b16 %v1400
    %v1555 = vunpack.c.l.b16 %v1401
    %v1556 = vunpack.c.h.b16 %v1401
    %v1557 = vunpack.c.l.b16 %v1402
    %v1558 = vunpack.c.h.b16 %v1402
    %v1559 = vunpack.c.l.b16 %v1403
    %v1560 = vunpack.c.h.b16 %v1403
    %v1561 = vunpack.c.l.b16 %v1404
    %v1562 = vunpack.c.h.b16 %v1404
    %v1563 = vunpack.c.l.b16 %v1405
    %v1564 = vunpack.c.h.b16 %v1405
    %v1565 = vunpack.c.l.b16 %v1406
    %v1566 = vunpack.c.h.b16 %v1406
    %v1567 = vunpack.c.l.b16 %v1407
    %v1568 = vunpack.c.h.b16 %v1407
    %v1569 = vunpack.c.l.b16 %v1408
    %v1570 = vunpack.c.h.b16 %v1408
    %v1571 = vunpack.c.l.b16 %v1409
    %v1572 = vunpack.c.h.b16 %v1409
    %v1573 = vunpack.c.l.b16 %v1410
    %v1574 = vunpack.c.h.b16 %v1410
    %v1575 = vunpack.c.l.b16 %v1411
    %v1576 = vunpack.c.h.b16 %v1411
    %v1577 = vunpack.c.l.b16 %v1412
    %v1578 = vunpack.c.h.b16 %v1412
    %v1579 = vunpack.c.l.b16 %v1413
    %v1580 = vunpack.c.h.b16 %v1413
    %v1581 = vpack.c.b16 %v1521, %v1517
    %v1582 = vpack.c.b16 %v1522, %v1518
    %v1583 = vpack.c.b16 %v1523, %v1519
    %v1584 = vpack.c.b16 %v1524, %v1520
    %v1585 = vpack.c.b16 %v1529, %v1525
    %v1586 = vpack.c.b16 %v1530, %v1526
    %v1587 = vpack.c.b16 %v1531, %v1527
    %v1588 = vpack.c.b16 %v1532, %v1528
    %v1589 = vpack.c.b16 %v1537, %v1533
    %v1590 = vpack.c.b16 %v1538, %v1534
    %v1591 = vpack.c.b16 %v1539, %v1535
    %v1592 = vpack.c.b16 %v1540, %v1536
    %v1593 = vpack.c.b16 %v1545, %v1541
    %v1594 = vpack.c.b16 %v1546, %v1542
    %v1595 = vpack.c.b16 %v1547, %v1543
    %v1596 = vpack.c.b16 %v1548, %v1544
    %v1597 = vpack.c.b16 %v1553, %v1549
    %v1598 = vpack.c.b16 %v1554, %v1550
    %v1599 = vpack.c.b16 %v1555, %v1551
    %v1600 = vpack.c.b16 %v1556, %v1552
    %v1601 = vpack.c.b16 %v1561, %v1557
    %v1602 = vpack.c.b16 %v1562, %v1558
    %v1603 = vpack.c.b16 %v1563, %v1559
    %v1604 = vpack.c.b16 %v1564, %v1560
    %v1605 = vpack.c.b16 %v1569, %v1565
    %v1606 = vpack.c.b16 %v1570, %v1566
    %v1607 = vpack.c.b16 %v1571, %v1567
    %v1608 = vpack.c.b16 %v1572, %v1568
    %v1609 = vpack.c.b16 %v1577, %v1573
    %v1610 = vpack.c.b16 %v1578, %v1574
    %v1611 = vpack.c.b16 %v1579, %v1575
    %v1612 = vpack.c.b16 %v1580, %v1576
    %v1709 = vunpack.c.l.b16 %v1414
    %v1710 = vunpack.c.l.b16 %v1415
    %v1711 = vunpack.c.l.b16 %v1416
    %v1712 = vunpack.c.l.b16 %v1417
    %v1713 = vunpack.c.l.b16 %v1418
    %v1714 = vunpack.c.l.b16 %v1419
    %v1715 = vunpack.c.l.b16 %v1420
    %v1716 = vunpack.c.l.b16 %v1421
    %v1717 = vunpack.c.l.b16 %v1422
    %v1718 = vunpack.c.l.b16 %v1423
    %v1719 = vunpack.c.l.b16 %v1424
    %v1720 = vunpack.c.l.b16 %v1425
    %v1721 = vunpack.c.l.b16 %v1426
    %v1722 = vunpack.c.l.b16 %v1427
    %v1723 = vunpack.c.l.b16 %v1428
    %v1724 = vunpack.c.l.b16 %v1429
    %v1725 = vunpack.c.l.b16 %v1430
    %v1726 = vunpack.c.l.b16 %v1431
    %v1727 = vunpack.c.l.b16 %v1432
    %v1728 = vunpack.c.l.b16 %v1433
    %v1729 = vunpack.c.l.b16 %v1434
    %v1730 = vunpack.c.l.b16 %v1435
    %v1731 = vunpack.c.l.b16 %v1436
    %v1732 = vunpack.c.l.b16 %v1437
    %v1733 = vunpack.c.l.b16 %v1438
    %v1734 = vunpack.c.l.b16 %v1439
    %v1735 = vunpack.c.l.b16 %v1440
    %v1736 = vunpack.c.l.b16 %v1441
    %v1737 = vunpack.c.l.b16 %v1442
    %v1738 = vunpack.c.l.b16 %v1443
    %v1739 = vunpack.c.l.b16 %v1444
    %v1740 = vunpack.c.l.b16 %v1445
    %v1741 = vunpack.c.l.b16 %v1446
    %v1742 = vunpack.c.l.b16 %v1447
    %v1743 = vunpack.c.l.b16 %v1448
    %v1744 = vunpack.c.l.b16 %v1449
    %v1745 = vunpack.c.l.b16 %v1450
    %v1746 = vunpack.c.l.b16 %v1451
    %v1747 = vunpack.c.l.b16 %v1452
    %v1748 = vunpack.c.l.b16 %v1453
    %v1749 = vunpack.c.l.b16 %v1454
    %v1750 = vunpack.c.l.b16 %v1455
    %v1751 = vunpack.c.l.b16 %v1456
    %v1752 = vunpack.c.l.b16 %v1457
    %v1753 = vunpack.c.l.b16 %v1458
    %v1754 = vunpack.c.l.b16 %v1459
    %v1755 = vunpack.c.l.b16 %v1460
    %v1756 = vunpack.c.l.b16 %v1461
    %v1757 = vunpack.c.l.b16 %v1462
    %v1758 = vunpack.c.l.b16 %v1463
    %v1759 = vunpack.c.l.b16 %v1464
    %v1760 = vunpack.c.l.b16 %v1465
    %v1761 = vunpack.c.l.b16 %v1466
    %v1762 = vunpack.c.l.b16 %v1467
    %v1763 = vunpack.c.l.b16 %v1468
    %v1764 = vunpack.c.l.b16 %v1469
    %v1765 = vunpack.c.l.b16 %v1470
    %v1766 = vunpack.c.l.b16 %v1471
    %v1767 = vunpack.c.l.b16 %v1472
    %v1768 = vunpack.c.l.b16 %v1473
    %v1769 = vunpack.c.l.b16 %v1474
    %v1770 = vunpack.c.l.b16 %v1475
    %v1771 = vunpack.c.l.b16 %v1476
    %v1772 = vunpack.c.l.b16 %v1477
    %v1773 = vpack.c.b16 %v1710, %v1709
    %v1774 = vpack.c.b16 %v1712, %v1711
    %v1775 = vpack.c.b16 %v1714, %v1713
    %v1776 = vpack.c.b16 %v1716, %v1715
    %v1777 = vpack.c.b16 %v1718, %v1717
    %v1778 = vpack.c.b16 %v1720, %v1719
    %v1779 = vpack.c.b16 %v1722, %v1721
    %v1780 = vpack.c.b16 %v1724, %v1723
    %v1781 = vpack.c.b16 %v1726, %v1725
    %v1782 = vpack.c.b16 %v1728, %v1727
    %v1783 = vpack.c.b16 %v1730, %v1729
    %v1784 = vpack.c.b16 %v1732, %v1731
    %v1785 = vpack.c.b16 %v1734, %v1733
    %v1786 = vpack.c.b16 %v1736, %v1735
    %v1787 = vpack.c.b16 %v1738, %v1737
    %v1788 = vpack.c.b16 %v1740, %v1739
    %v1789 = vpack.c.b16 %v1742, %v1741
    %v1790 = vpack.c.b16 %v1744, %v1743
    %v1791 = vpack.c.b16 %v1746, %v1745
    %v1792 = vpack.c.b16 %v1748, %v1747
    %v1793 = vpack.c.b16 %v1750, %v1749
    %v1794 = vpack.c.b16 %v1752, %v1751
    %v1795 = vpack.c.b16 %v1754, %v1753
    %v1796 = vpack.c.b16 %v1756, %v1755
    %v1797 = vpack.c.b16 %v1758, %v1757
    %v1798 = vpack.c.b16 %v1760, %v1759
    %v1799 = vpack.c.b16 %v1762, %v1761
    %v1800 = vpack.c.b16 %v1764, %v1763
    %v1801 = vpack.c.b16 %v1766, %v1765
    %v1802 = vpack.c.b16 %v1768, %v1767
    %v1803 = vpack.c.b16 %v1770, %v1769
    %v1804 = vpack.c.b16 %v1772, %v1771
    %1837 = vmatprep.subr.bf16.mxu0 0
    %1838 = vmatpush1.bf16.msra.mxu0 %v1780
    %1839 = vmatprep.subr.bf16.mxu0 0
    %1840 = vmatpush1.bf16.msra.mxu0 %v1779
    %1841 = vmatprep.subr.bf16.mxu0 0
    %1842 = vmatpush1.bf16.msra.mxu0 %v1778
    %1843 = vmatprep.subr.bf16.mxu0 0
    %1844 = vmatpush1.bf16.msra.mxu0 %v1777
    %1845 = vmatprep.subr.bf16.mxu0 0
    %1846 = vmatpush1.bf16.msra.mxu0 %v1776
    %1847 = vmatprep.subr.bf16.mxu0 0
    %1848 = vmatpush1.bf16.msra.mxu0 %v1775
    %1849 = vmatprep.subr.bf16.mxu0 0
    %1850 = vmatpush1.bf16.msra.mxu0 %v1774
    %1851 = vmatprep.subr.bf16.mxu0 0
    %1852 = vmatpush1.bf16.msra.mxu0 %v1773
    %1853 = vmatprep.subr.bf16.mxu0 0
    %1854 = vmatpush2.bf16.msra.mxu0 %v1788
    %1855 = vmatprep.subr.bf16.mxu0 0
    %1856 = vmatpush2.bf16.msra.mxu0 %v1787
    %1857 = vmatprep.subr.bf16.mxu0 0
    %1858 = vmatpush2.bf16.msra.mxu0 %v1786
    %1859 = vmatprep.subr.bf16.mxu0 0
    %1860 = vmatpush2.bf16.msra.mxu0 %v1785
    %1861 = vmatprep.subr.bf16.mxu0 0
    %1862 = vmatpush2.bf16.msra.mxu0 %v1784
    %1863 = vmatprep.subr.bf16.mxu0 0
    %1864 = vmatpush2.bf16.msra.mxu0 %v1783
    %1865 = vmatprep.subr.bf16.mxu0 0
    %1866 = vmatpush2.bf16.msra.mxu0 %v1782
    %1867 = vmatprep.subr.bf16.mxu0 0
    %1868 = vmatpush2.bf16.msra.mxu0 %v1781
    %1869 = vmatprep.mubr.bf16.mxu0 %v1582
    %1870 = vmatmul.mubr.bf16.gmra.mxu0 %v1581
    %v1871 = vpop.f32.mrf.mxu0
    %v1872 = vadd.f32 %v1483, %v1871
    %v1873 = vpop.f32.mrf.mxu0
    %v1874 = vpop.f32.mrf.mxu0
    %v1875 = vadd.f32 %v1483, %v1874
    %v1876 = vpop.f32.mrf.mxu0
    %1877 = vmatprep.mubr.bf16.mxu0 %v1586
    %1878 = vmatmul.mubr.bf16.gmra.mxu0 %v1585
    %v1879 = vpop.f32.mrf.mxu0
    %v1880 = vadd.f32 %v1483, %v1879
    %v1881 = vpop.f32.mrf.mxu0
    %v1882 = vpop.f32.mrf.mxu0
    %v1883 = vadd.f32 %v1483, %v1882
    %v1884 = vpop.f32.mrf.mxu0
    %1885 = vmatprep.mubr.bf16.mxu0 %v1590
    %1886 = vmatmul.mubr.bf16.gmra.mxu0 %v1589
    %v1887 = vpop.f32.mrf.mxu0
    %v1888 = vadd.f32 %v1483, %v1887
    %v1889 = vpop.f32.mrf.mxu0
    %v1890 = vpop.f32.mrf.mxu0
    %v1891 = vadd.f32 %v1483, %v1890
    %v1892 = vpop.f32.mrf.mxu0
    %1893 = vmatprep.mubr.bf16.mxu0 %v1594
    %1894 = vmatmul.mubr.bf16.gmra.mxu0 %v1593
    %v1895 = vpop.f32.mrf.mxu0
    %v1896 = vadd.f32 %v1483, %v1895
    %v1897 = vpop.f32.mrf.mxu0
    %v1898 = vpop.f32.mrf.mxu0
    %v1899 = vadd.f32 %v1483, %v1898
    %v1900 = vpop.f32.mrf.mxu0
    %1901 = vmatprep.mubr.bf16.mxu0 %v1598
    %1902 = vmatmul.mubr.bf16.gmra.mxu0 %v1597
    %v1903 = vpop.f32.mrf.mxu0
    %v1904 = vadd.f32 %v1483, %v1903
    %v1905 = vpop.f32.mrf.mxu0
    %v1906 = vpop.f32.mrf.mxu0
    %v1907 = vadd.f32 %v1483, %v1906
    %v1908 = vpop.f32.mrf.mxu0
    %1909 = vmatprep.mubr.bf16.mxu0 %v1602
    %1910 = vmatmul.mubr.bf16.gmra.mxu0 %v1601
    %v1911 = vpop.f32.mrf.mxu0
    %v1912 = vadd.f32 %v1483, %v1911
    %v1913 = vpop.f32.mrf.mxu0
    %v1914 = vpop.f32.mrf.mxu0
    %v1915 = vadd.f32 %v1483, %v1914
    %v1916 = vpop.f32.mrf.mxu0
    %1917 = vmatprep.mubr.bf16.mxu0 %v1606
    %1918 = vmatmul.mubr.bf16.gmra.mxu0 %v1605
    %v1919 = vpop.f32.mrf.mxu0
    %v1920 = vadd.f32 %v1483, %v1919
    %v1921 = vpop.f32.mrf.mxu0
    %v1922 = vpop.f32.mrf.mxu0
    %v1923 = vadd.f32 %v1483, %v1922
    %v1924 = vpop.f32.mrf.mxu0
    %1925 = vmatprep.mubr.bf16.mxu0 %v1610
    %1926 = vmatmul.mubr.bf16.gmra.mxu0 %v1609
    %v1927 = vpop.f32.mrf.mxu0
    %v1928 = vadd.f32 %v1483, %v1927
    %v1929 = vpop.f32.mrf.mxu0
    %v1930 = vpop.f32.mrf.mxu0
    %v1931 = vadd.f32 %v1483, %v1930
    %v1932 = vpop.f32.mrf.mxu0
    %1933 = vdwg.mxu0
    %1934 = vmatprep.subr.bf16.mxu0 0
    %1935 = vmatpush1.bf16.msra.mxu0 %v1796
    %1936 = vmatprep.subr.bf16.mxu0 0
    %1937 = vmatpush1.bf16.msra.mxu0 %v1795
    %1938 = vmatprep.subr.bf16.mxu0 0
    %1939 = vmatpush1.bf16.msra.mxu0 %v1794
    %1940 = vmatprep.subr.bf16.mxu0 0
    %1941 = vmatpush1.bf16.msra.mxu0 %v1793
    %1942 = vmatprep.subr.bf16.mxu0 0
    %1943 = vmatpush1.bf16.msra.mxu0 %v1792
    %1944 = vmatprep.subr.bf16.mxu0 0
    %1945 = vmatpush1.bf16.msra.mxu0 %v1791
    %1946 = vmatprep.subr.bf16.mxu0 0
    %1947 = vmatpush1.bf16.msra.mxu0 %v1790
    %1948 = vmatprep.subr.bf16.mxu0 0
    %1949 = vmatpush1.bf16.msra.mxu0 %v1789
    %1950 = vmatprep.subr.bf16.mxu0 0
    %1951 = vmatpush2.bf16.msra.mxu0 %v1804
    %1952 = vmatprep.subr.bf16.mxu0 0
    %1953 = vmatpush2.bf16.msra.mxu0 %v1803
    %1954 = vmatprep.subr.bf16.mxu0 0
    %1955 = vmatpush2.bf16.msra.mxu0 %v1802
    %1956 = vmatprep.subr.bf16.mxu0 0
    %1957 = vmatpush2.bf16.msra.mxu0 %v1801
    %1958 = vmatprep.subr.bf16.mxu0 0
    %1959 = vmatpush2.bf16.msra.mxu0 %v1800
    %1960 = vmatprep.subr.bf16.mxu0 0
    %1961 = vmatpush2.bf16.msra.mxu0 %v1799
    %1962 = vmatprep.subr.bf16.mxu0 0
    %1963 = vmatpush2.bf16.msra.mxu0 %v1798
    %1964 = vmatprep.subr.bf16.mxu0 0
    %1965 = vmatpush2.bf16.msra.mxu0 %v1797
    %1966 = vmatprep.mubr.bf16.mxu0 %v1584
    %1967 = vmatmul.mubr.bf16.gmra.mxu0 %v1583
    %v1968 = vpop.f32.mrf.mxu0
    %v1969 = vadd.f32 %v1872, %v1968
    %v1970 = vpop.f32.mrf.mxu0
    %v1971 = vpop.f32.mrf.mxu0
    %v1972 = vadd.f32 %v1875, %v1971
    %v1973 = vpop.f32.mrf.mxu0
    %1974 = vmatprep.mubr.bf16.mxu0 %v1588
    %1975 = vmatmul.mubr.bf16.gmra.mxu0 %v1587
    %v1976 = vpop.f32.mrf.mxu0
    %v1977 = vadd.f32 %v1880, %v1976
    %v1978 = vpop.f32.mrf.mxu0
    %v1979 = vpop.f32.mrf.mxu0
    %v1980 = vadd.f32 %v1883, %v1979
    %v1981 = vpop.f32.mrf.mxu0
    %1982 = vmatprep.mubr.bf16.mxu0 %v1592
    %1983 = vmatmul.mubr.bf16.gmra.mxu0 %v1591
    %v1984 = vpop.f32.mrf.mxu0
    %v1985 = vadd.f32 %v1888, %v1984
    %v1986 = vpop.f32.mrf.mxu0
    %v1987 = vpop.f32.mrf.mxu0
    %v1988 = vadd.f32 %v1891, %v1987
    %v1989 = vpop.f32.mrf.mxu0
    %1990 = vmatprep.mubr.bf16.mxu0 %v1596
    %1991 = vmatmul.mubr.bf16.gmra.mxu0 %v1595
    %v1992 = vpop.f32.mrf.mxu0
    %v1993 = vadd.f32 %v1896, %v1992
    %v1994 = vpop.f32.mrf.mxu0
    %v1995 = vpop.f32.mrf.mxu0
    %v1996 = vadd.f32 %v1899, %v1995
    %v1997 = vpop.f32.mrf.mxu0
    %1998 = vmatprep.mubr.bf16.mxu0 %v1600
    %1999 = vmatmul.mubr.bf16.gmra.mxu0 %v1599
    %v2000 = vpop.f32.mrf.mxu0
    %v2001 = vadd.f32 %v1904, %v2000
    %v2002 = vpop.f32.mrf.mxu0
    %v2003 = vpop.f32.mrf.mxu0
    %v2004 = vadd.f32 %v1907, %v2003
    %v2005 = vpop.f32.mrf.mxu0
    %2006 = vmatprep.mubr.bf16.mxu0 %v1604
    %2007 = vmatmul.mubr.bf16.gmra.mxu0 %v1603
    %v2008 = vpop.f32.mrf.mxu0
    %v2009 = vadd.f32 %v1912, %v2008
    %v2010 = vpop.f32.mrf.mxu0
    %v2011 = vpop.f32.mrf.mxu0
    %v2012 = vadd.f32 %v1915, %v2011
    %v2013 = vpop.f32.mrf.mxu0
    %2014 = vmatprep.mubr.bf16.mxu0 %v1608
    %2015 = vmatmul.mubr.bf16.gmra.mxu0 %v1607
    %v2016 = vpop.f32.mrf.mxu0
    %v2017 = vadd.f32 %v1920, %v2016
    %v2018 = vpop.f32.mrf.mxu0
    %v2019 = vpop.f32.mrf.mxu0
    %v2020 = vadd.f32 %v1923, %v2019
    %v2021 = vpop.f32.mrf.mxu0
    %2022 = vmatprep.mubr.bf16.mxu0 %v1612
    %2023 = vmatmul.mubr.bf16.gmra.mxu0 %v1611
    %v2024 = vpop.f32.mrf.mxu0
    %v2025 = vadd.f32 %v1928, %v2024
    %v2026 = vpop.f32.mrf.mxu0
    %v2027 = vpop.f32.mrf.mxu0
    %v2028 = vadd.f32 %v1931, %v2027
    %v2029 = vpop.f32.mrf.mxu0
    %2030 = vdwg.mxu0
    %v2031 = vmax.f32 %v1969, 0.0
    %v2032 = vmax.f32 %v1972, 0.0
    %v2033 = vmax.f32 %v1977, 0.0
    %v2034 = vmax.f32 %v1980, 0.0
    %v2035 = vmax.f32 %v1985, 0.0
    %v2036 = vmax.f32 %v1988, 0.0
    %v2037 = vmax.f32 %v1993, 0.0
    %v2038 = vmax.f32 %v1996, 0.0
    %v2039 = vmax.f32 %v2001, 0.0
    %v2040 = vmax.f32 %v2004, 0.0
    %v2041 = vmax.f32 %v2009, 0.0
    %v2042 = vmax.f32 %v2012, 0.0
    %v2043 = vmax.f32 %v2017, 0.0
    %v2044 = vmax.f32 %v2020, 0.0
    %v2045 = vmax.f32 %v2025, 0.0
    %v2046 = vmax.f32 %v2028, 0.0
    %v2047 = vpack.c.bf16 %v2032, %v2031
    %v2048 = vpack.c.bf16 %v2034, %v2033
    %v2049 = vpack.c.bf16 %v2036, %v2035
    %v2050 = vpack.c.bf16 %v2038, %v2037
    %v2051 = vpack.c.bf16 %v2040, %v2039
    %v2052 = vpack.c.bf16 %v2042, %v2041
    %v2053 = vpack.c.bf16 %v2044, %v2043
    %v2054 = vpack.c.bf16 %v2046, %v2045
    %v2055 = vld [vmem:[%s5] sm:$0xf]
    %v2056 = vld [vmem:[%s5 + $0x4] sm:$0xf]
    %v2057 = vld [vmem:[%s5 + $0x8] sm:$0xf]
    %v2058 = vld [vmem:[%s5 + $0xc] sm:$0xf]
    %v2059 = vld [vmem:[%s5 + $0x10] sm:$0xf]
    %v2060 = vld [vmem:[%s5 + $0x14] sm:$0xf]
    %v2061 = vld [vmem:[%s5 + $0x18] sm:$0xf]
    %v2062 = vld [vmem:[%s5 + $0x1c] sm:$0xf]
    %v2063 = vld [vmem:[%s5 + $0x20] sm:$0xf]
    %v2064 = vld [vmem:[%s5 + $0x24] sm:$0xf]
    %v2065 = vld [vmem:[%s5 + $0x28] sm:$0xf]
    %v2066 = vld [vmem:[%s5 + $0x2c] sm:$0xf]
    %v2067 = vld [vmem:[%s5 + $0x30] sm:$0xf]
    %v2068 = vld [vmem:[%s5 + $0x34] sm:$0xf]
    %v2069 = vld [vmem:[%s5 + $0x38] sm:$0xf]
    %v2070 = vld [vmem:[%s5 + $0x3c] sm:$0xf]
    %v2071 = vld [vmem:[%s6] sm:$0x1]
    %v2073 = vlaneseq
    %v2074 = vshrl.u32 %v2073, 7
    %v2075 = vsub.s32 0, %v2074
    %v2076 = vrot.slane %v2071, %v2075
    %v2094 = vunpack.c.l.b16 %v2055
    %v2095 = vunpack.c.l.b16 %v2056
    %v2096 = vunpack.c.l.b16 %v2057
    %v2097 = vunpack.c.l.b16 %v2058
    %v2098 = vunpack.c.l.b16 %v2059
    %v2099 = vunpack.c.l.b16 %v2060
    %v2100 = vunpack.c.l.b16 %v2061
    %v2101 = vunpack.c.l.b16 %v2062
    %v2102 = vunpack.c.l.b16 %v2063
    %v2103 = vunpack.c.l.b16 %v2064
    %v2104 = vunpack.c.l.b16 %v2065
    %v2105 = vunpack.c.l.b16 %v2066
    %v2106 = vunpack.c.l.b16 %v2067
    %v2107 = vunpack.c.l.b16 %v2068
    %v2108 = vunpack.c.l.b16 %v2069
    %v2109 = vunpack.c.l.b16 %v2070
    %v2110 = vpack.c.b16 %v2095, %v2094
    %v2111 = vpack.c.b16 %v2097, %v2096
    %v2112 = vpack.c.b16 %v2099, %v2098
    %v2113 = vpack.c.b16 %v2101, %v2100
    %v2114 = vpack.c.b16 %v2103, %v2102
    %v2115 = vpack.c.b16 %v2105, %v2104
    %v2116 = vpack.c.b16 %v2107, %v2106
    %v2117 = vpack.c.b16 %v2109, %v2108
    %2126 = vmatprep.subr.bf16.mxu0 0
    %2127 = vmatpush1.bf16.msra.mxu0 %v2117
    %2128 = vmatprep.subr.bf16.mxu0 0
    %2129 = vmatpush1.bf16.msra.mxu0 %v2116
    %2130 = vmatprep.subr.bf16.mxu0 0
    %2131 = vmatpush1.bf16.msra.mxu0 %v2115
    %2132 = vmatprep.subr.bf16.mxu0 0
    %2133 = vmatpush1.bf16.msra.mxu0 %v2114
    %2134 = vmatprep.subr.bf16.mxu0 0
    %2135 = vmatpush1.bf16.msra.mxu0 %v2113
    %2136 = vmatprep.subr.bf16.mxu0 0
    %2137 = vmatpush1.bf16.msra.mxu0 %v2112
    %2138 = vmatprep.subr.bf16.mxu0 0
    %2139 = vmatpush1.bf16.msra.mxu0 %v2111
    %2140 = vmatprep.subr.bf16.mxu0 0
    %2141 = vmatpush1.bf16.msra.mxu0 %v2110
    %2142 = vmatprep.subr.bf16.mxu0 0
    %2143 = vmatpush2.bf16.msra.mxu0 0
    %2144 = vmatprep.subr.bf16.mxu0 0
    %2145 = vmatpush2.bf16.msra.mxu0 0
    %2146 = vmatprep.subr.bf16.mxu0 0
    %2147 = vmatpush2.bf16.msra.mxu0 0
    %2148 = vmatprep.subr.bf16.mxu0 0
    %2149 = vmatpush2.bf16.msra.mxu0 0
    %2150 = vmatprep.subr.bf16.mxu0 0
    %2151 = vmatpush2.bf16.msra.mxu0 0
    %2152 = vmatprep.subr.bf16.mxu0 0
    %2153 = vmatpush2.bf16.msra.mxu0 0
    %2154 = vmatprep.subr.bf16.mxu0 0
    %2155 = vmatpush2.bf16.msra.mxu0 0
    %2156 = vmatprep.subr.bf16.mxu0 0
    %2157 = vmatpush2.bf16.msra.mxu0 0
    %2158 = vmatprep.mubr.bf16.mxu0 0
    %2159 = vmatmul.mubr.bf16.gmra.mxu0 %v2047
    %v2160 = vpop.f32.mrf.mxu0
    %v2161 = vadd.f32 %v2076, %v2160
    %v2162 = vpop.f32.mrf.mxu0
    %v2163 = vpop.f32.mrf.mxu0
    %v2164 = vadd.f32 %v2076, %v2163
    %v2165 = vpop.f32.mrf.mxu0
    %2166 = vmatprep.mubr.bf16.mxu0 0
    %2167 = vmatmul.mubr.bf16.gmra.mxu0 %v2048
    %v2168 = vpop.f32.mrf.mxu0
    %v2169 = vadd.f32 %v2076, %v2168
    %v2170 = vpop.f32.mrf.mxu0
    %v2171 = vpop.f32.mrf.mxu0
    %v2172 = vadd.f32 %v2076, %v2171
    %v2173 = vpop.f32.mrf.mxu0
    %2174 = vmatprep.mubr.bf16.mxu0 0
    %2175 = vmatmul.mubr.bf16.gmra.mxu0 %v2049
    %v2176 = vpop.f32.mrf.mxu0
    %v2177 = vadd.f32 %v2076, %v2176
    %v2178 = vpop.f32.mrf.mxu0
    %v2179 = vpop.f32.mrf.mxu0
    %v2180 = vadd.f32 %v2076, %v2179
    %v2181 = vpop.f32.mrf.mxu0
    %2182 = vmatprep.mubr.bf16.mxu0 0
    %2183 = vmatmul.mubr.bf16.gmra.mxu0 %v2050
    %v2184 = vpop.f32.mrf.mxu0
    %v2185 = vadd.f32 %v2076, %v2184
    %v2186 = vpop.f32.mrf.mxu0
    %v2187 = vpop.f32.mrf.mxu0
    %v2188 = vadd.f32 %v2076, %v2187
    %v2189 = vpop.f32.mrf.mxu0
    %2190 = vmatprep.mubr.bf16.mxu0 0
    %2191 = vmatmul.mubr.bf16.gmra.mxu0 %v2051
    %v2192 = vpop.f32.mrf.mxu0
    %v2193 = vadd.f32 %v2076, %v2192
    %v2194 = vpop.f32.mrf.mxu0
    %v2195 = vpop.f32.mrf.mxu0
    %v2196 = vadd.f32 %v2076, %v2195
    %v2197 = vpop.f32.mrf.mxu0
    %2198 = vmatprep.mubr.bf16.mxu0 0
    %2199 = vmatmul.mubr.bf16.gmra.mxu0 %v2052
    %v2200 = vpop.f32.mrf.mxu0
    %v2201 = vadd.f32 %v2076, %v2200
    %v2202 = vpop.f32.mrf.mxu0
    %v2203 = vpop.f32.mrf.mxu0
    %v2204 = vadd.f32 %v2076, %v2203
    %v2205 = vpop.f32.mrf.mxu0
    %2206 = vmatprep.mubr.bf16.mxu0 0
    %2207 = vmatmul.mubr.bf16.gmra.mxu0 %v2053
    %v2208 = vpop.f32.mrf.mxu0
    %v2209 = vadd.f32 %v2076, %v2208
    %v2210 = vpop.f32.mrf.mxu0
    %v2211 = vpop.f32.mrf.mxu0
    %v2212 = vadd.f32 %v2076, %v2211
    %v2213 = vpop.f32.mrf.mxu0
    %2214 = vmatprep.mubr.bf16.mxu0 0
    %2215 = vmatmul.mubr.bf16.gmra.mxu0 %v2054
    %v2216 = vpop.f32.mrf.mxu0
    %v2217 = vadd.f32 %v2076, %v2216
    %v2218 = vpop.f32.mrf.mxu0
    %v2219 = vpop.f32.mrf.mxu0
    %v2220 = vadd.f32 %v2076, %v2219
    %v2221 = vpop.f32.mrf.mxu0
    %2222 = vdwg.mxu0
    %v2223 = vmax.f32 %v2161, 0.0
    %v2224 = vmax.f32 %v2164, 0.0
    %v2225 = vmax.f32 %v2169, 0.0
    %v2226 = vmax.f32 %v2172, 0.0
    %v2227 = vmax.f32 %v2177, 0.0
    %v2228 = vmax.f32 %v2180, 0.0
    %v2229 = vmax.f32 %v2185, 0.0
    %v2230 = vmax.f32 %v2188, 0.0
    %v2231 = vmax.f32 %v2193, 0.0
    %v2232 = vmax.f32 %v2196, 0.0
    %v2233 = vmax.f32 %v2201, 0.0
    %v2234 = vmax.f32 %v2204, 0.0
    %v2235 = vmax.f32 %v2209, 0.0
    %v2236 = vmax.f32 %v2212, 0.0
    %v2237 = vmax.f32 %v2217, 0.0
    %v2238 = vmax.f32 %v2220, 0.0
    %v2239 = vpack.c.bf16 %v2224, %v2223
    %v2240 = vpack.c.bf16 %v2226, %v2225
    %v2241 = vpack.c.bf16 %v2228, %v2227
    %v2242 = vpack.c.bf16 %v2230, %v2229
    %v2243 = vpack.c.bf16 %v2232, %v2231
    %v2244 = vpack.c.bf16 %v2234, %v2233
    %v2245 = vpack.c.bf16 %v2236, %v2235
    %v2246 = vpack.c.bf16 %v2238, %v2237
    %v2247 = vld [vmem:[%s7] sm:$0xf]
    %v2248 = vld [vmem:[%s7 + $0x4] sm:$0xf]
    %v2249 = vld [vmem:[%s7 + $0x8] sm:$0xf]
    %v2250 = vld [vmem:[%s7 + $0xc] sm:$0xf]
    %v2251 = vld [vmem:[%s7 + $0x10] sm:$0xf]
    %v2252 = vld [vmem:[%s7 + $0x14] sm:$0xf]
    %v2253 = vld [vmem:[%s7 + $0x18] sm:$0xf]
    %v2254 = vld [vmem:[%s7 + $0x1c] sm:$0xf]
    %v2255 = vld [vmem:[%s7 + $0x20] sm:$0xf]
    %v2256 = vld [vmem:[%s7 + $0x24] sm:$0xf]
    %v2257 = vld [vmem:[%s7 + $0x28] sm:$0xf]
    %v2258 = vld [vmem:[%s7 + $0x2c] sm:$0xf]
    %v2259 = vld [vmem:[%s7 + $0x30] sm:$0xf]
    %v2260 = vld [vmem:[%s7 + $0x34] sm:$0xf]
    %v2261 = vld [vmem:[%s7 + $0x38] sm:$0xf]
    %v2262 = vld [vmem:[%s7 + $0x3c] sm:$0xf]
    %v2263 = vld [vmem:[%s8] sm:$0x1]
    %v2265 = vlaneseq
    %v2266 = vshrl.u32 %v2265, 7
    %v2267 = vsub.s32 0, %v2266
    %v2268 = vrot.slane %v2263, %v2267
    %v2286 = vunpack.c.l.b16 %v2247
    %v2287 = vunpack.c.l.b16 %v2248
    %v2288 = vunpack.c.l.b16 %v2249
    %v2289 = vunpack.c.l.b16 %v2250
    %v2290 = vunpack.c.l.b16 %v2251
    %v2291 = vunpack.c.l.b16 %v2252
    %v2292 = vunpack.c.l.b16 %v2253
    %v2293 = vunpack.c.l.b16 %v2254
    %v2294 = vunpack.c.l.b16 %v2255
    %v2295 = vunpack.c.l.b16 %v2256
    %v2296 = vunpack.c.l.b16 %v2257
    %v2297 = vunpack.c.l.b16 %v2258
    %v2298 = vunpack.c.l.b16 %v2259
    %v2299 = vunpack.c.l.b16 %v2260
    %v2300 = vunpack.c.l.b16 %v2261
    %v2301 = vunpack.c.l.b16 %v2262
    %v2302 = vpack.c.b16 %v2287, %v2286
    %v2303 = vpack.c.b16 %v2289, %v2288
    %v2304 = vpack.c.b16 %v2291, %v2290
    %v2305 = vpack.c.b16 %v2293, %v2292
    %v2306 = vpack.c.b16 %v2295, %v2294
    %v2307 = vpack.c.b16 %v2297, %v2296
    %v2308 = vpack.c.b16 %v2299, %v2298
    %v2309 = vpack.c.b16 %v2301, %v2300
    %2318 = vmatprep.subr.bf16.mxu0 0
    %2319 = vmatpush1.bf16.msra.mxu0 %v2309
    %2320 = vmatprep.subr.bf16.mxu0 0
    %2321 = vmatpush1.bf16.msra.mxu0 %v2308
    %2322 = vmatprep.subr.bf16.mxu0 0
    %2323 = vmatpush1.bf16.msra.mxu0 %v2307
    %2324 = vmatprep.subr.bf16.mxu0 0
    %2325 = vmatpush1.bf16.msra.mxu0 %v2306
    %2326 = vmatprep.subr.bf16.mxu0 0
    %2327 = vmatpush1.bf16.msra.mxu0 %v2305
    %2328 = vmatprep.subr.bf16.mxu0 0
    %2329 = vmatpush1.bf16.msra.mxu0 %v2304
    %2330 = vmatprep.subr.bf16.mxu0 0
    %2331 = vmatpush1.bf16.msra.mxu0 %v2303
    %2332 = vmatprep.subr.bf16.mxu0 0
    %2333 = vmatpush1.bf16.msra.mxu0 %v2302
    %2334 = vmatprep.subr.bf16.mxu0 0
    %2335 = vmatpush2.bf16.msra.mxu0 0
    %2336 = vmatprep.subr.bf16.mxu0 0
    %2337 = vmatpush2.bf16.msra.mxu0 0
    %2338 = vmatprep.subr.bf16.mxu0 0
    %2339 = vmatpush2.bf16.msra.mxu0 0
    %2340 = vmatprep.subr.bf16.mxu0 0
    %2341 = vmatpush2.bf16.msra.mxu0 0
    %2342 = vmatprep.subr.bf16.mxu0 0
    %2343 = vmatpush2.bf16.msra.mxu0 0
    %2344 = vmatprep.subr.bf16.mxu0 0
    %2345 = vmatpush2.bf16.msra.mxu0 0
    %2346 = vmatprep.subr.bf16.mxu0 0
    %2347 = vmatpush2.bf16.msra.mxu0 0
    %2348 = vmatprep.subr.bf16.mxu0 0
    %2349 = vmatpush2.bf16.msra.mxu0 0
    %2350 = vmatprep.mubr.bf16.mxu0 0
    %2351 = vmatmul.mubr.bf16.gmra.mxu0 %v2239
    %v2352 = vpop.f32.mrf.mxu0
    %v2353 = vadd.f32 %v2268, %v2352
    %v2354 = vpop.f32.mrf.mxu0
    %v2355 = vpop.f32.mrf.mxu0
    %v2356 = vadd.f32 %v2268, %v2355
    %v2357 = vpop.f32.mrf.mxu0
    %2358 = vmatprep.mubr.bf16.mxu0 0
    %2359 = vmatmul.mubr.bf16.gmra.mxu0 %v2240
    %v2360 = vpop.f32.mrf.mxu0
    %v2361 = vadd.f32 %v2268, %v2360
    %v2362 = vpop.f32.mrf.mxu0
    %v2363 = vpop.f32.mrf.mxu0
    %v2364 = vadd.f32 %v2268, %v2363
    %v2365 = vpop.f32.mrf.mxu0
    %2366 = vmatprep.mubr.bf16.mxu0 0
    %2367 = vmatmul.mubr.bf16.gmra.mxu0 %v2241
    %v2368 = vpop.f32.mrf.mxu0
    %v2369 = vadd.f32 %v2268, %v2368
    %v2370 = vpop.f32.mrf.mxu0
    %v2371 = vpop.f32.mrf.mxu0
    %v2372 = vadd.f32 %v2268, %v2371
    %v2373 = vpop.f32.mrf.mxu0
    %2374 = vmatprep.mubr.bf16.mxu0 0
    %2375 = vmatmul.mubr.bf16.gmra.mxu0 %v2242
    %v2376 = vpop.f32.mrf.mxu0
    %v2377 = vadd.f32 %v2268, %v2376
    %v2378 = vpop.f32.mrf.mxu0
    %v2379 = vpop.f32.mrf.mxu0
    %v2380 = vadd.f32 %v2268, %v2379
    %v2381 = vpop.f32.mrf.mxu0
    %2382 = vmatprep.mubr.bf16.mxu0 0
    %2383 = vmatmul.mubr.bf16.gmra.mxu0 %v2243
    %v2384 = vpop.f32.mrf.mxu0
    %v2385 = vadd.f32 %v2268, %v2384
    %v2386 = vpop.f32.mrf.mxu0
    %v2387 = vpop.f32.mrf.mxu0
    %v2388 = vadd.f32 %v2268, %v2387
    %v2389 = vpop.f32.mrf.mxu0
    %2390 = vmatprep.mubr.bf16.mxu0 0
    %2391 = vmatmul.mubr.bf16.gmra.mxu0 %v2244
    %v2392 = vpop.f32.mrf.mxu0
    %v2393 = vadd.f32 %v2268, %v2392
    %v2394 = vpop.f32.mrf.mxu0
    %v2395 = vpop.f32.mrf.mxu0
    %v2396 = vadd.f32 %v2268, %v2395
    %v2397 = vpop.f32.mrf.mxu0
    %2398 = vmatprep.mubr.bf16.mxu0 0
    %2399 = vmatmul.mubr.bf16.gmra.mxu0 %v2245
    %v2400 = vpop.f32.mrf.mxu0
    %v2401 = vadd.f32 %v2268, %v2400
    %v2402 = vpop.f32.mrf.mxu0
    %v2403 = vpop.f32.mrf.mxu0
    %v2404 = vadd.f32 %v2268, %v2403
    %v2405 = vpop.f32.mrf.mxu0
    %2406 = vmatprep.mubr.bf16.mxu0 0
    %2407 = vmatmul.mubr.bf16.gmra.mxu0 %v2246
    %v2408 = vpop.f32.mrf.mxu0
    %v2409 = vadd.f32 %v2268, %v2408
    %v2410 = vpop.f32.mrf.mxu0
    %v2411 = vpop.f32.mrf.mxu0
    %v2412 = vadd.f32 %v2268, %v2411
    %v2413 = vpop.f32.mrf.mxu0
    %2414 = vdwg.mxu0
    %v2415 = vpack.c.bf16 %v2356, %v2353
    %v2416 = vpack.c.bf16 %v2364, %v2361
    %v2417 = vpack.c.bf16 %v2372, %v2369
    %v2418 = vpack.c.bf16 %v2380, %v2377
    %v2419 = vpack.c.bf16 %v2388, %v2385
    %v2420 = vpack.c.bf16 %v2396, %v2393
    %v2421 = vpack.c.bf16 %v2404, %v2401
    %v2422 = vpack.c.bf16 %v2412, %v2409
    %v2431 = vunpack.c.l.b16 %v2415
    %v2432 = vunpack.c.h.b16 %v2415
    %v2433 = vunpack.c.l.b16 %v2416
    %v2434 = vunpack.c.h.b16 %v2416
    %v2435 = vunpack.c.l.b16 %v2417
    %v2436 = vunpack.c.h.b16 %v2417
    %v2437 = vunpack.c.l.b16 %v2418
    %v2438 = vunpack.c.h.b16 %v2418
    %v2439 = vunpack.c.l.b16 %v2419
    %v2440 = vunpack.c.h.b16 %v2419
    %v2441 = vunpack.c.l.b16 %v2420
    %v2442 = vunpack.c.h.b16 %v2420
    %v2443 = vunpack.c.l.b16 %v2421
    %v2444 = vunpack.c.h.b16 %v2421
    %v2445 = vunpack.c.l.b16 %v2422
    %v2446 = vunpack.c.h.b16 %v2422
    %v2447 = vpack.c.b16 %v2431, %v2431
    %v2448 = vpack.c.b16 %v2432, %v2432
    %v2449 = vpack.c.b16 %v2433, %v2433
    %v2450 = vpack.c.b16 %v2434, %v2434
    %v2451 = vpack.c.b16 %v2435, %v2435
    %v2452 = vpack.c.b16 %v2436, %v2436
    %v2453 = vpack.c.b16 %v2437, %v2437
    %v2454 = vpack.c.b16 %v2438, %v2438
    %v2455 = vpack.c.b16 %v2439, %v2439
    %v2456 = vpack.c.b16 %v2440, %v2440
    %v2457 = vpack.c.b16 %v2441, %v2441
    %v2458 = vpack.c.b16 %v2442, %v2442
    %v2459 = vpack.c.b16 %v2443, %v2443
    %v2460 = vpack.c.b16 %v2444, %v2444
    %v2461 = vpack.c.b16 %v2445, %v2445
    %v2462 = vpack.c.b16 %v2446, %v2446
    %2479 = vst [vmem:[%s9] sm:$0xf] %v2447
    %2480 = vst [vmem:[%s9 + $0x4] sm:$0xf] %v2448
    %2481 = vst [vmem:[%s9 + $0x8] sm:$0xf] %v2449
    %2482 = vst [vmem:[%s9 + $0xc] sm:$0xf] %v2450
    %2483 = vst [vmem:[%s9 + $0x10] sm:$0xf] %v2451
    %2484 = vst [vmem:[%s9 + $0x14] sm:$0xf] %v2452
    %2485 = vst [vmem:[%s9 + $0x18] sm:$0xf] %v2453
    %2486 = vst [vmem:[%s9 + $0x1c] sm:$0xf] %v2454
    %2487 = vst [vmem:[%s9 + $0x20] sm:$0xf] %v2455
    %2488 = vst [vmem:[%s9 + $0x24] sm:$0xf] %v2456
    %2489 = vst [vmem:[%s9 + $0x28] sm:$0xf] %v2457
    %2490 = vst [vmem:[%s9 + $0x2c] sm:$0xf] %v2458
    %2491 = vst [vmem:[%s9 + $0x30] sm:$0xf] %v2459
    %2492 = vst [vmem:[%s9 + $0x34] sm:$0xf] %v2460
    %2493 = vst [vmem:[%s9 + $0x38] sm:$0xf] %v2461
    %2494 = vst [vmem:[%s9 + $0x3c] sm:$0xf] %v2462
    // Predicated region
    $region46: #{dgaze_forward_pallas.1} parent=1 // pred_check
      _
    $region47: #{dgaze_forward_pallas.1} parent=1 // pred_check_branch
      %2496 = sbr.rel (0) target = $region49
    $region48: #{dgaze_forward_pallas.1} parent=1 // pred_region
      _
    $region49: #{dgaze_forward_pallas.1} parent=1 // pred_fallthru
      _
    // Predicated region
    $region50: #{dgaze_forward_pallas.1} parent=1 // pred_check
      _
    $region51: #{dgaze_forward_pallas.1} parent=1 // pred_check_branch
      %2498 = sbr.rel (0) target = $region53
    $region52: #{dgaze_forward_pallas.1} parent=1 // pred_region
      _
    $region53: #{dgaze_forward_pallas.1} parent=1 // pred_fallthru
      _
    %2499 = vsyncpa [#allocation4], 1
    %2500 = vsyncpa [#allocation6], 1

</llo_original>
